<compile_context>
chip_gen: v5e
topology: v5e:2x2
jax: 0.10.0
libtpu: 0.0.40
codegen_flags: <defaults>
</compile_context>

<pallas_src>
import functools

import jax
import jax.numpy as jnp
from jax.experimental import pallas as pl
from jax.experimental.pallas import tpu as pltpu


def _leaky_relu(x, slope=0.2):
    return jnp.where(x > 0, x, slope * x)


def _round_up(n, m):
    return ((n + m - 1) // m) * m


def _discriminator_kernel(x_ref,            # (2, T)     f32   batch on lanes
                          w1_ref, b1_ref,   # (256, 2), (256, 1)       f32
                          w2_ref, b2_ref,   # (256, 256) bf16, (256, 1) ep
                          w3_ref, b3_ref,   # (256, 256) bf16, (256, 1) ep
                          w4_ref,           # (1, 256)   bf16
                          b4_ref,           # (1, 1)     f32  (SMEM scalar)
                          o_ref,            # (1, T)     f32
                          *, ep_dtype):
    x = x_ref[...]
    w1 = w1_ref[...]

    # Layer 1 (K = 2): two broadcast-FMAs on the VPU; the x rows broadcast
    # along sublanes for free (stride-0), no MXU pass needed.
    h = w1[:, 0:1] * x[0:1, :] + w1[:, 1:2] * x[1:2, :] + b1_ref[...]
    h = _leaky_relu(h).astype(jnp.bfloat16)                       # (256, T)

    # Layers 2 & 3: bf16 MXU matmuls, f32 accumulation; epilogue (bias +
    # LeakyReLU) in ep_dtype (bf16 on v6e/v7x, f32 on v5e), single cast back
    # to bf16 for the next matmul.
    z = jnp.dot(w2_ref[...], h, preferred_element_type=jnp.float32)
    h = _leaky_relu(z.astype(ep_dtype) + b2_ref[...]).astype(jnp.bfloat16)

    z = jnp.dot(w3_ref[...], h, preferred_element_type=jnp.float32)
    h = _leaky_relu(z.astype(ep_dtype) + b3_ref[...]).astype(jnp.bfloat16)

    # Layer 4 (out_features = 1): (1,256) x (256,T) on the MXU, f32 acc;
    # bias is a scalar add from SMEM; sigmoid on the EUP; full-lane store.
    logits = jnp.dot(w4_ref[...], h, preferred_element_type=jnp.float32)
    logits = logits + b4_ref[0, 0]
    o_ref[...] = jax.nn.sigmoid(logits)


def default_epilogue_dtype():
    """bf16 epilogue where the VPU supports it (v6e/v7x); f32 on v5 chips."""
    try:
        kind = jax.devices()[0].device_kind.lower()
    except Exception:
        return jnp.float32
    return jnp.float32 if "v5" in kind else jnp.bfloat16


def prepare_params(params, ep_dtype=None):
    """One-time parameter massaging (transposes / bf16 casts), hoisted out of
    the per-forward path so each call does no weight-side HBM work."""
    if ep_dtype is None:
        ep_dtype = default_epilogue_dtype()
    w1, b1, w2, b2, w3, b3, w4, b4 = params
    return dict(
        ep_dtype=ep_dtype,
        w1t=jnp.asarray(w1, jnp.float32).T,                   # (256, 2)
        b1c=jnp.asarray(b1, jnp.float32).reshape(256, 1),
        w2t=jnp.asarray(w2, jnp.bfloat16).T,                  # (out, in)
        b2c=jnp.asarray(b2, ep_dtype).reshape(256, 1),
        w3t=jnp.asarray(w3, jnp.bfloat16).T,                  # (out, in)
        b3c=jnp.asarray(b3, ep_dtype).reshape(256, 1),
        w4r=jnp.asarray(w4, jnp.bfloat16).reshape(1, 256),    # (1, 256)
        b4s=jnp.asarray(b4, jnp.float32).reshape(1, 1),       # SMEM scalar
    )


def discriminator_forward(x, prepared, *, tile_b=2048):
    """x: (B, 2) float32 -> (B, 1) float32. `prepared` = prepare_params(...)."""
    ep_dtype = prepared["ep_dtype"]
    B = x.shape[0]

    # Batch sits on the lane axis -> tiles are multiples of 128 lanes.
    b128 = _round_up(B, 128)
    tile_b = min(tile_b, b128)
    # Keep >= 2 grid steps when the batch allows it so both v7x TensorCores
    # get work under dimension_semantics=("parallel",).
    if b128 > 128 and b128 // tile_b < 2:
        tile_b = _round_up((b128 + 1) // 2, 128)
    b_pad = _round_up(b128, tile_b)

    xt = jnp.asarray(x, jnp.float32).T                        # (2, B)
    if b_pad != B:
        xt = jnp.pad(xt, ((0, 0), (0, b_pad - B)))

    grid = (b_pad // tile_b,)
    batch_map = lambda i: (0, i)
    const_map = lambda i: (0, 0)   # weights/biases stay VMEM-resident

    weights = (prepared["w1t"], prepared["b1c"],
               prepared["w2t"], prepared["b2c"],
               prepared["w3t"], prepared["b3c"],
               prepared["w4r"], prepared["b4s"])
    weight_bytes = sum(int(w.size) * w.dtype.itemsize for w in weights)
    cost = pl.CostEstimate(
        flops=2 * b_pad * (2 * 256 + 256 * 256 + 256 * 256 + 256),
        transcendentals=b_pad,                     # sigmoid
        bytes_accessed=b_pad * (2 + 1) * 4 + weight_bytes,
    )

    kernel = functools.partial(_discriminator_kernel, ep_dtype=ep_dtype)

    out = pl.pallas_call(
        kernel,
        out_shape=jax.ShapeDtypeStruct((1, b_pad), jnp.float32),
        grid=grid,
        in_specs=[
            pl.BlockSpec((2, tile_b), batch_map),               # x^T
            pl.BlockSpec((256, 2), const_map),                  # w1^T
            pl.BlockSpec((256, 1), const_map),                  # b1
            pl.BlockSpec((256, 256), const_map),                # w2^T (bf16)
            pl.BlockSpec((256, 1), const_map),                  # b2
            pl.BlockSpec((256, 256), const_map),                # w3^T (bf16)
            pl.BlockSpec((256, 1), const_map),                  # b3
            pl.BlockSpec((1, 256), const_map),                  # w4 row (bf16)
            pl.BlockSpec(memory_space=pltpu.MemorySpace.SMEM),  # b4 scalar
        ],
        out_specs=pl.BlockSpec((1, tile_b), batch_map),
        compiler_params=pltpu.CompilerParams(
            dimension_semantics=("parallel",),     # megacore split on v7x
            vmem_limit_bytes=32 * 1024 * 1024,
        ),
        cost_estimate=cost,
    )(xt, *weights)

    return out[0, :B].reshape(B, 1)


def init_params(key):
    """Deterministic init mimicking PyTorch nn.Linear default:
    U(-1/sqrt(fan_in), 1/sqrt(fan_in)) for both weight and bias.
    Weights stored (in, out), biases (1, out)."""
    dims = [(2, 256), (256, 256), (256, 256), (256, 1)]
    params = []
    keys = jax.random.split(key, 2 * len(dims))
    for i, (fan_in, fan_out) in enumerate(dims):
        bound = 1.0 / jnp.sqrt(jnp.float32(fan_in))
        w = jax.random.uniform(keys[2 * i], (fan_in, fan_out),
                               minval=-bound, maxval=bound, dtype=jnp.float32)
        b = jax.random.uniform(keys[2 * i + 1], (1, fan_out),
                               minval=-bound, maxval=bound, dtype=jnp.float32)
        params.extend([w, b])
    return tuple(params)


def reference_forward(x, params):
    """Pure-JAX f32 reference matching the PyTorch module."""
    w1, b1, w2, b2, w3, b3, w4, b4 = params
    h = x @ w1 + b1
    h = jnp.where(h > 0, h, 0.2 * h)
    h = h @ w2 + b2
    h = jnp.where(h > 0, h, 0.2 * h)
    h = h @ w3 + b3
    h = jnp.where(h > 0, h, 0.2 * h)
    return jax.nn.sigmoid(h @ w4 + b4)


if __name__ == "__main__":
    key = jax.random.PRNGKey(0)
    pkey, xkey1, xkey2 = jax.random.split(key, 3)
    params = init_params(pkey)
    prepared = prepare_params(params)   # hoisted: weight casts done once

    # Small batch (single-tile path, matches nn.Linear(2, 256) input shape).
    x_small = jax.random.normal(xkey1, (8, 2), dtype=jnp.float32)
    out_small = jax.block_until_ready(discriminator_forward(x_small, prepared))
    ref_small = reference_forward(x_small, params)
    assert out_small.shape == (8, 1)
    # bf16 matmuls/weights => relaxed tolerance vs the f32 reference.
    assert jnp.allclose(out_small, ref_small, atol=2e-2, rtol=2e-2)

    # Larger batch that is not a multiple of the tile (padding + >=2 grid
    # steps so the megacore path is exercised).
    x_big = jax.random.normal(xkey2, (1000, 2), dtype=jnp.float32)
    out_big = jax.block_until_ready(discriminator_forward(x_big, prepared))
    ref_big = reference_forward(x_big, params)
    assert out_big.shape == (1000, 1)
    assert jnp.allclose(out_big, ref_big, atol=2e-2, rtol=2e-2)

    print("KERNEL_OK")
</pallas_src>

<mosaic_0001>
module attributes {stable_mosaic.version = 11 : i64} {
  func.func @_discriminator_kernel(%arg0: i32, %arg1: memref<2x128xf32, #tpu.memory_space<vmem>>, %arg2: memref<256x2xf32, #tpu.memory_space<vmem>>, %arg3: memref<256x1xf32, #tpu.memory_space<vmem>>, %arg4: memref<256x256xbf16, #tpu.memory_space<vmem>>, %arg5: memref<256x1xbf16, #tpu.memory_space<vmem>>, %arg6: memref<256x256xbf16, #tpu.memory_space<vmem>>, %arg7: memref<256x1xbf16, #tpu.memory_space<vmem>>, %arg8: memref<1x256xbf16, #tpu.memory_space<vmem>>, %arg9: memref<1x1xf32, #tpu.memory_space<smem>>, %arg10: memref<1x128xf32, #tpu.memory_space<vmem>>) attributes {dimension_semantics = [#tpu.dimension_semantics<parallel>], iteration_bounds = array<i64: 1>, scalar_prefetch = 0 : i64, scratch_operands = 0 : i64, tpu.core_type = #tpu.core_type<tc>, window_params = [{transform_indices = @transform_0, window_bounds = array<i64: 2, 128>}, {pipeline_mode = #tpu.pipeline_mode<synchronous>, transform_indices = @transform_1, window_bounds = array<i64: 256, 2>}, {pipeline_mode = #tpu.pipeline_mode<synchronous>, transform_indices = @transform_2, window_bounds = array<i64: 256, 1>}, {pipeline_mode = #tpu.pipeline_mode<synchronous>, transform_indices = @transform_3, window_bounds = array<i64: 256, 256>}, {pipeline_mode = #tpu.pipeline_mode<synchronous>, transform_indices = @transform_4, window_bounds = array<i64: 256, 1>}, {pipeline_mode = #tpu.pipeline_mode<synchronous>, transform_indices = @transform_5, window_bounds = array<i64: 256, 256>}, {pipeline_mode = #tpu.pipeline_mode<synchronous>, transform_indices = @transform_6, window_bounds = array<i64: 256, 1>}, {pipeline_mode = #tpu.pipeline_mode<synchronous>, transform_indices = @transform_7, window_bounds = array<i64: 1, 256>}, {transform_indices = @transform_8, window_bounds = array<i64: 1, 1>}, {transform_indices = @transform_9, window_bounds = array<i64: 1, 128>}]} {
    %c0 = arith.constant 0 : index
    %c0_0 = arith.constant 0 : index
    %0 = vector.load %arg1[%c0, %c0_0] : memref<2x128xf32, #tpu.memory_space<vmem>>, vector<2x128xf32>
    %c0_1 = arith.constant 0 : index
    %c0_2 = arith.constant 0 : index
    %1 = vector.load %arg2[%c0_1, %c0_2] : memref<256x2xf32, #tpu.memory_space<vmem>>, vector<256x2xf32>
    %2 = vector.extract_strided_slice %1 {offsets = [0, 0], sizes = [256, 1], strides = [1, 1]} : vector<256x2xf32> to vector<256x1xf32>
    %3 = vector.extract_strided_slice %0 {offsets = [0, 0], sizes = [1, 128], strides = [1, 1]} : vector<2x128xf32> to vector<1x128xf32>
    %4 = vector.broadcast %2 : vector<256x1xf32> to vector<256x128xf32>
    %5 = vector.broadcast %3 : vector<1x128xf32> to vector<256x128xf32>
    %6 = arith.mulf %4, %5 : vector<256x128xf32>
    %7 = vector.extract_strided_slice %1 {offsets = [0, 1], sizes = [256, 1], strides = [1, 1]} : vector<256x2xf32> to vector<256x1xf32>
    %8 = vector.extract_strided_slice %0 {offsets = [1, 0], sizes = [1, 128], strides = [1, 1]} : vector<2x128xf32> to vector<1x128xf32>
    %9 = vector.broadcast %7 : vector<256x1xf32> to vector<256x128xf32>
    %10 = vector.broadcast %8 : vector<1x128xf32> to vector<256x128xf32>
    %11 = arith.mulf %9, %10 : vector<256x128xf32>
    %12 = arith.addf %6, %11 : vector<256x128xf32>
    %c0_3 = arith.constant 0 : index
    %c0_4 = arith.constant 0 : index
    %13 = vector.load %arg3[%c0_3, %c0_4] : memref<256x1xf32, #tpu.memory_space<vmem>>, vector<256x1xf32>
    %14 = vector.broadcast %13 : vector<256x1xf32> to vector<256x128xf32>
    %15 = arith.addf %12, %14 : vector<256x128xf32>
    %cst = arith.constant 0.000000e+00 : f32
    %16 = vector.broadcast %cst : f32 to vector<256x128xf32>
    %17 = arith.cmpf ogt, %15, %16 : vector<256x128xf32>
    %cst_5 = arith.constant 2.000000e-01 : f32
    %18 = vector.broadcast %cst_5 : f32 to vector<256x128xf32>
    %19 = arith.mulf %18, %15 : vector<256x128xf32>
    %20 = arith.select %17, %15, %19 : vector<256x128xi1>, vector<256x128xf32>
    %21 = arith.truncf %20 : vector<256x128xf32> to vector<256x128xbf16>
    %c0_6 = arith.constant 0 : index
    %c0_7 = arith.constant 0 : index
    %22 = vector.load %arg4[%c0_6, %c0_7] : memref<256x256xbf16, #tpu.memory_space<vmem>>, vector<256x256xbf16>
    %cst_8 = arith.constant dense<0.000000e+00> : vector<256x128xf32>
    %23 = tpu.matmul %22, %21, %cst_8 {dimension_numbers = #tpu.dot_dimension_numbers<[1], [0], [0], [1], [0, 0, 1, 1], [], []>} : vector<256x256xbf16>, vector<256x128xbf16>, vector<256x128xf32> -> vector<256x128xf32>
    %24 = arith.truncf %23 : vector<256x128xf32> to vector<256x128xbf16>
    %c0_9 = arith.constant 0 : index
    %c0_10 = arith.constant 0 : index
    %25 = vector.load %arg5[%c0_9, %c0_10] : memref<256x1xbf16, #tpu.memory_space<vmem>>, vector<256x1xbf16>
    %26 = vector.broadcast %25 : vector<256x1xbf16> to vector<256x128xbf16>
    %27 = arith.addf %24, %26 : vector<256x128xbf16>
    %cst_11 = arith.constant 0.000000e+00 : bf16
    %28 = vector.broadcast %cst_11 : bf16 to vector<256x128xbf16>
    %29 = arith.cmpf ogt, %27, %28 : vector<256x128xbf16>
    %cst_12 = arith.constant 2.001950e-01 : bf16
    %30 = vector.broadcast %cst_12 : bf16 to vector<256x128xbf16>
    %31 = arith.mulf %30, %27 : vector<256x128xbf16>
    %32 = arith.select %29, %27, %31 : vector<256x128xi1>, vector<256x128xbf16>
    %c0_13 = arith.constant 0 : index
    %c0_14 = arith.constant 0 : index
    %33 = vector.load %arg6[%c0_13, %c0_14] : memref<256x256xbf16, #tpu.memory_space<vmem>>, vector<256x256xbf16>
    %cst_15 = arith.constant dense<0.000000e+00> : vector<256x128xf32>
    %34 = tpu.matmul %33, %32, %cst_15 {dimension_numbers = #tpu.dot_dimension_numbers<[1], [0], [0], [1], [0, 0, 1, 1], [], []>} : vector<256x256xbf16>, vector<256x128xbf16>, vector<256x128xf32> -> vector<256x128xf32>
    %35 = arith.truncf %34 : vector<256x128xf32> to vector<256x128xbf16>
    %c0_16 = arith.constant 0 : index
    %c0_17 = arith.constant 0 : index
    %36 = vector.load %arg7[%c0_16, %c0_17] : memref<256x1xbf16, #tpu.memory_space<vmem>>, vector<256x1xbf16>
    %37 = vector.broadcast %36 : vector<256x1xbf16> to vector<256x128xbf16>
    %38 = arith.addf %35, %37 : vector<256x128xbf16>
    %cst_18 = arith.constant 0.000000e+00 : bf16
    %39 = vector.broadcast %cst_18 : bf16 to vector<256x128xbf16>
    %40 = arith.cmpf ogt, %38, %39 : vector<256x128xbf16>
    %cst_19 = arith.constant 2.001950e-01 : bf16
    %41 = vector.broadcast %cst_19 : bf16 to vector<256x128xbf16>
    %42 = arith.mulf %41, %38 : vector<256x128xbf16>
    %43 = arith.select %40, %38, %42 : vector<256x128xi1>, vector<256x128xbf16>
    %c0_20 = arith.constant 0 : index
    %c0_21 = arith.constant 0 : index
    %44 = vector.load %arg8[%c0_20, %c0_21] : memref<1x256xbf16, #tpu.memory_space<vmem>>, vector<1x256xbf16>
    %cst_22 = arith.constant dense<0.000000e+00> : vector<1x128xf32>
    %45 = tpu.matmul %44, %43, %cst_22 {dimension_numbers = #tpu.dot_dimension_numbers<[1], [0], [0], [1], [0, 0, 1, 1], [], []>} : vector<1x256xbf16>, vector<256x128xbf16>, vector<1x128xf32> -> vector<1x128xf32>
    %c0_23 = arith.constant 0 : index
    %c0_24 = arith.constant 0 : index
    %46 = memref.load %arg9[%c0_23, %c0_24] : memref<1x1xf32, #tpu.memory_space<smem>>
    %47 = vector.broadcast %46 : f32 to vector<1x128xf32>
    %48 = arith.addf %45, %47 : vector<1x128xf32>
    %49 = arith.negf %48 : vector<1x128xf32>
    %50 = math.exp %49 : vector<1x128xf32>
    %cst_25 = arith.constant 1.000000e+00 : f32
    %51 = vector.broadcast %cst_25 : f32 to vector<1x128xf32>
    %52 = arith.addf %51, %50 : vector<1x128xf32>
    %53 = arith.divf %51, %52 : vector<1x128xf32>
    %c0_26 = arith.constant 0 : index
    %c0_27 = arith.constant 0 : index
    %54 = vector.load %arg10[%c0_26, %c0_27] : memref<1x128xf32, #tpu.memory_space<vmem>>, vector<1x128xf32>
    tpu.vector_store %arg10[%c0_26, %c0_27], %53 {strides = array<i32>} : memref<1x128xf32, #tpu.memory_space<vmem>>, vector<1x128xf32>,
    return
  }
  func.func @transform_0(%arg0: i32) -> (i32, i32) {
    %c0_i32 = arith.constant 0 : i32
    %c0_i32_0 = arith.constant 0 : i32
    return %c0_i32, %arg0 : i32, i32
  }
  func.func @transform_1(%arg0: i32) -> (i32, i32) {
    %c0_i32 = arith.constant 0 : i32
    %c0_i32_0 = arith.constant 0 : i32
    %c0_i32_1 = arith.constant 0 : i32
    return %c0_i32, %c0_i32_0 : i32, i32
  }
  func.func @transform_2(%arg0: i32) -> (i32, i32) {
    %c0_i32 = arith.constant 0 : i32
    %c0_i32_0 = arith.constant 0 : i32
    %c0_i32_1 = arith.constant 0 : i32
    return %c0_i32, %c0_i32_0 : i32, i32
  }
  func.func @transform_3(%arg0: i32) -> (i32, i32) {
    %c0_i32 = arith.constant 0 : i32
    %c0_i32_0 = arith.constant 0 : i32
    %c0_i32_1 = arith.constant 0 : i32
    return %c0_i32, %c0_i32_0 : i32, i32
  }
  func.func @transform_4(%arg0: i32) -> (i32, i32) {
    %c0_i32 = arith.constant 0 : i32
    %c0_i32_0 = arith.constant 0 : i32
    %c0_i32_1 = arith.constant 0 : i32
    return %c0_i32, %c0_i32_0 : i32, i32
  }
  func.func @transform_5(%arg0: i32) -> (i32, i32) {
    %c0_i32 = arith.constant 0 : i32
    %c0_i32_0 = arith.constant 0 : i32
    %c0_i32_1 = arith.constant 0 : i32
    return %c0_i32, %c0_i32_0 : i32, i32
  }
  func.func @transform_6(%arg0: i32) -> (i32, i32) {
    %c0_i32 = arith.constant 0 : i32
    %c0_i32_0 = arith.constant 0 : i32
    %c0_i32_1 = arith.constant 0 : i32
    return %c0_i32, %c0_i32_0 : i32, i32
  }
  func.func @transform_7(%arg0: i32) -> (i32, i32) {
    %c0_i32 = arith.constant 0 : i32
    %c0_i32_0 = arith.constant 0 : i32
    %c0_i32_1 = arith.constant 0 : i32
    return %c0_i32, %c0_i32_0 : i32, i32
  }
  func.func @transform_8(%arg0: i32) -> (i32, i32) {
    %c0_i32 = arith.constant 0 : i32
    %c0_i32_0 = arith.constant 0 : i32
    %c0_i32_1 = arith.constant 0 : i32
    return %c0_i32, %c0_i32_0 : i32, i32
  }
  func.func @transform_9(%arg0: i32) -> (i32, i32) {
    %c0_i32 = arith.constant 0 : i32
    %c0_i32_0 = arith.constant 0 : i32
    return %c0_i32, %arg0 : i32, i32
  }
}

</mosaic_0001>

<llo_original>
// kernel: tpu_custom_call.1
$region0: #{tpu_custom_call.1}
  #allocation0 [shape = 'u32[]', space=smem, size = 0x4, offset = 0x4, fixed_abs, tag = 'smem constant byte address 0x4 - core index']
  #allocation1 [shape = 'u32[72,128]{1,0:T(1,128)}', space=vmem, size = 0x9000, scoped, tag = 'internal scratch']
  #allocation2 [shape = 'f32[1,1]{1,0:T(1,128)S(6)}', space=smem, size = 0x200, scoped, tag = 'scoped memory for tpu_custom_call.1']
  %s0 = inlined_call_operand.vmem [shape: f32[2,128], index: 0, kind: input, shape index: {}]
  %s1 = inlined_call_operand.vmem [shape: f32[256,2], index: 1, kind: input, shape index: {}]
  %s2 = inlined_call_operand.vmem [shape: f32[256,1], index: 2, kind: input, shape index: {}]
  %s3 = inlined_call_operand.vmem [shape: bf16[256,256], index: 3, kind: input, shape index: {}]
  %s4 = inlined_call_operand.vmem [shape: bf16[256,1], index: 4, kind: input, shape index: {}]
  %s5 = inlined_call_operand.vmem [shape: bf16[256,256], index: 5, kind: input, shape index: {}]
  %s6 = inlined_call_operand.vmem [shape: bf16[256,1], index: 6, kind: input, shape index: {}]
  %s7 = inlined_call_operand.vmem [shape: bf16[1,256], index: 7, kind: input, shape index: {}]
  %s8 = inlined_call_operand.<no memory space> [shape: f32[1,1], index: 8, kind: input, shape index: {}]
  %s9 = inlined_call_operand.hbm [shape: f32[1,128], index: 9, kind: output, shape index: {}]
  %s10 = sld [smem:[#allocation0]]
  $region46: #{tpu_custom_call.1} parent=0
    _
  %s12 = ssub.s32 1, %s10
  %s13 = scalar_select 0, %s12, %s10
  %14 = sst [smem:[#allocation2]] %s8
  $region1: #{tpu_custom_call.1} parent=0
    #allocation3 [shape = 'u8[512]{0}', space=vmem, size = 0x400, scoped, tag = 'output window, operand 0, single buffered']
    #allocation4 [shape = 's32[1]{0}', space=sflag, size = 0x4, scoped, tag = 'scoped memory for tpu_custom_call.1']
    %15 = vsyncpa [#allocation4], 0
    // Predicated region
    $region2: #{tpu_custom_call.1} parent=1 // pred_check
      _
    $region3: #{tpu_custom_call.1} parent=1 // pred_check_branch
      %17 = sbr.rel (0) target = $region5
    $region4: #{tpu_custom_call.1} parent=1 // pred_region
      _
    $region5: #{tpu_custom_call.1} parent=1 // pred_fallthru
      _
    // Predicated region
    $region6: #{tpu_custom_call.1} parent=1 // pred_check
      _
    $region7: #{tpu_custom_call.1} parent=1 // pred_check_branch
      %19 = sbr.rel (0) target = $region9
    $region8: #{tpu_custom_call.1} parent=1 // pred_region
      _
    $region9: #{tpu_custom_call.1} parent=1 // pred_fallthru
      _
    // Predicated region
    $region10: #{tpu_custom_call.1} parent=1 // pred_check
      _
    $region11: #{tpu_custom_call.1} parent=1 // pred_check_branch
      %21 = sbr.rel (0) target = $region13
    $region12: #{tpu_custom_call.1} parent=1 // pred_region
      _
    $region13: #{tpu_custom_call.1} parent=1 // pred_fallthru
      _
    // Predicated region
    $region14: #{tpu_custom_call.1} parent=1 // pred_check
      _
    $region15: #{tpu_custom_call.1} parent=1 // pred_check_branch
      %23 = sbr.rel (0) target = $region17
    $region16: #{tpu_custom_call.1} parent=1 // pred_region
      _
    $region17: #{tpu_custom_call.1} parent=1 // pred_fallthru
      _
    // Predicated region
    $region18: #{tpu_custom_call.1} parent=1 // pred_check
      _
    $region19: #{tpu_custom_call.1} parent=1 // pred_check_branch
      %25 = sbr.rel (0) target = $region21
    $region20: #{tpu_custom_call.1} parent=1 // pred_region
      _
    $region21: #{tpu_custom_call.1} parent=1 // pred_fallthru
      _
    // Predicated region
    $region22: #{tpu_custom_call.1} parent=1 // pred_check
      _
    $region23: #{tpu_custom_call.1} parent=1 // pred_check_branch
      %27 = sbr.rel (0) target = $region25
    $region24: #{tpu_custom_call.1} parent=1 // pred_region
      _
    $region25: #{tpu_custom_call.1} parent=1 // pred_fallthru
      _
    // Predicated region
    $region26: #{tpu_custom_call.1} parent=1 // pred_check
      _
    $region27: #{tpu_custom_call.1} parent=1 // pred_check_branch
      %29 = sbr.rel (0) target = $region29
    $region28: #{tpu_custom_call.1} parent=1 // pred_region
      _
    $region29: #{tpu_custom_call.1} parent=1 // pred_fallthru
      _
    // Predicated region
    $region30: #{tpu_custom_call.1} parent=1 // pred_check
      _
    $region31: #{tpu_custom_call.1} parent=1 // pred_check_branch
      %31 = sbr.rel (0) target = $region33
    $region32: #{tpu_custom_call.1} parent=1 // pred_region
      _
    $region33: #{tpu_custom_call.1} parent=1 // pred_fallthru
      _
    // Predicated region
    $region34: #{tpu_custom_call.1} parent=1 // pred_check
      _
    $region35: #{tpu_custom_call.1} parent=1 // pred_check_branch
      %33 = sbr.rel (0) target = $region37
    $region36: #{tpu_custom_call.1} parent=1 // pred_region
      _
    $region37: #{tpu_custom_call.1} parent=1 // pred_fallthru
      _
    %v34 = vld [vmem:[%s0] sm:$0x3]
    %v35 = vld [vmem:[%s1] sm:$0xff]
    %v36 = vld [vmem:[%s1 + $0x8] sm:$0xff]
    %v37 = vld [vmem:[%s1 + $0x10] sm:$0xff]
    %v38 = vld [vmem:[%s1 + $0x18] sm:$0xff]
    %v39 = vld [vmem:[%s1 + $0x20] sm:$0xff]
    %v40 = vld [vmem:[%s1 + $0x28] sm:$0xff]
    %v41 = vld [vmem:[%s1 + $0x30] sm:$0xff]
    %v42 = vld [vmem:[%s1 + $0x38] sm:$0xff]
    %v43 = vld [vmem:[%s1 + $0x40] sm:$0xff]
    %v44 = vld [vmem:[%s1 + $0x48] sm:$0xff]
    %v45 = vld [vmem:[%s1 + $0x50] sm:$0xff]
    %v46 = vld [vmem:[%s1 + $0x58] sm:$0xff]
    %v47 = vld [vmem:[%s1 + $0x60] sm:$0xff]
    %v48 = vld [vmem:[%s1 + $0x68] sm:$0xff]
    %v49 = vld [vmem:[%s1 + $0x70] sm:$0xff]
    %v50 = vld [vmem:[%s1 + $0x78] sm:$0xff]
    %v51 = vld [vmem:[%s1 + $0x80] sm:$0xff]
    %v52 = vld [vmem:[%s1 + $0x88] sm:$0xff]
    %v53 = vld [vmem:[%s1 + $0x90] sm:$0xff]
    %v54 = vld [vmem:[%s1 + $0x98] sm:$0xff]
    %v55 = vld [vmem:[%s1 + $0xa0] sm:$0xff]
    %v56 = vld [vmem:[%s1 + $0xa8] sm:$0xff]
    %v57 = vld [vmem:[%s1 + $0xb0] sm:$0xff]
    %v58 = vld [vmem:[%s1 + $0xb8] sm:$0xff]
    %v59 = vld [vmem:[%s1 + $0xc0] sm:$0xff]
    %v60 = vld [vmem:[%s1 + $0xc8] sm:$0xff]
    %v61 = vld [vmem:[%s1 + $0xd0] sm:$0xff]
    %v62 = vld [vmem:[%s1 + $0xd8] sm:$0xff]
    %v63 = vld [vmem:[%s1 + $0xe0] sm:$0xff]
    %v64 = vld [vmem:[%s1 + $0xe8] sm:$0xff]
    %v65 = vld [vmem:[%s1 + $0xf0] sm:$0xff]
    %v66 = vld [vmem:[%s1 + $0xf8] sm:$0xff]
    %68 = vset.pattern.permute.xlu0 0
    %69 = vperm.xlu0 %68, %v35
    %v70 = vpop.permute.xlu0 %69
    %73 = vset.pattern.permute.xlu0 0
    %74 = vperm.xlu0 %73, %v36
    %v75 = vpop.permute.xlu0 %74
    %78 = vset.pattern.permute.xlu0 0
    %79 = vperm.xlu0 %78, %v37
    %v80 = vpop.permute.xlu0 %79
    %83 = vset.pattern.permute.xlu0 0
    %84 = vperm.xlu0 %83, %v38
    %v85 = vpop.permute.xlu0 %84
    %88 = vset.pattern.permute.xlu0 0
    %89 = vperm.xlu0 %88, %v39
    %v90 = vpop.permute.xlu0 %89
    %93 = vset.pattern.permute.xlu0 0
    %94 = vperm.xlu0 %93, %v40
    %v95 = vpop.permute.xlu0 %94
    %98 = vset.pattern.permute.xlu0 0
    %99 = vperm.xlu0 %98, %v41
    %v100 = vpop.permute.xlu0 %99
    %103 = vset.pattern.permute.xlu0 0
    %104 = vperm.xlu0 %103, %v42
    %v105 = vpop.permute.xlu0 %104
    %108 = vset.pattern.permute.xlu0 0
    %109 = vperm.xlu0 %108, %v43
    %v110 = vpop.permute.xlu0 %109
    %113 = vset.pattern.permute.xlu0 0
    %114 = vperm.xlu0 %113, %v44
    %v115 = vpop.permute.xlu0 %114
    %118 = vset.pattern.permute.xlu0 0
    %119 = vperm.xlu0 %118, %v45
    %v120 = vpop.permute.xlu0 %119
    %123 = vset.pattern.permute.xlu0 0
    %124 = vperm.xlu0 %123, %v46
    %v125 = vpop.permute.xlu0 %124
    %128 = vset.pattern.permute.xlu0 0
    %129 = vperm.xlu0 %128, %v47
    %v130 = vpop.permute.xlu0 %129
    %133 = vset.pattern.permute.xlu0 0
    %134 = vperm.xlu0 %133, %v48
    %v135 = vpop.permute.xlu0 %134
    %138 = vset.pattern.permute.xlu0 0
    %139 = vperm.xlu0 %138, %v49
    %v140 = vpop.permute.xlu0 %139
    %143 = vset.pattern.permute.xlu0 0
    %144 = vperm.xlu0 %143, %v50
    %v145 = vpop.permute.xlu0 %144
    %148 = vset.pattern.permute.xlu0 0
    %149 = vperm.xlu0 %148, %v51
    %v150 = vpop.permute.xlu0 %149
    %153 = vset.pattern.permute.xlu0 0
    %154 = vperm.xlu0 %153, %v52
    %v155 = vpop.permute.xlu0 %154
    %158 = vset.pattern.permute.xlu0 0
    %159 = vperm.xlu0 %158, %v53
    %v160 = vpop.permute.xlu0 %159
    %163 = vset.pattern.permute.xlu0 0
    %164 = vperm.xlu0 %163, %v54
    %v165 = vpop.permute.xlu0 %164
    %168 = vset.pattern.permute.xlu0 0
    %169 = vperm.xlu0 %168, %v55
    %v170 = vpop.permute.xlu0 %169
    %173 = vset.pattern.permute.xlu0 0
    %174 = vperm.xlu0 %173, %v56
    %v175 = vpop.permute.xlu0 %174
    %178 = vset.pattern.permute.xlu0 0
    %179 = vperm.xlu0 %178, %v57
    %v180 = vpop.permute.xlu0 %179
    %183 = vset.pattern.permute.xlu0 0
    %184 = vperm.xlu0 %183, %v58
    %v185 = vpop.permute.xlu0 %184
    %188 = vset.pattern.permute.xlu0 0
    %189 = vperm.xlu0 %188, %v59
    %v190 = vpop.permute.xlu0 %189
    %193 = vset.pattern.permute.xlu0 0
    %194 = vperm.xlu0 %193, %v60
    %v195 = vpop.permute.xlu0 %194
    %198 = vset.pattern.permute.xlu0 0
    %199 = vperm.xlu0 %198, %v61
    %v200 = vpop.permute.xlu0 %199
    %203 = vset.pattern.permute.xlu0 0
    %204 = vperm.xlu0 %203, %v62
    %v205 = vpop.permute.xlu0 %204
    %208 = vset.pattern.permute.xlu0 0
    %209 = vperm.xlu0 %208, %v63
    %v210 = vpop.permute.xlu0 %209
    %213 = vset.pattern.permute.xlu0 0
    %214 = vperm.xlu0 %213, %v64
    %v215 = vpop.permute.xlu0 %214
    %218 = vset.pattern.permute.xlu0 0
    %219 = vperm.xlu0 %218, %v65
    %v220 = vpop.permute.xlu0 %219
    %223 = vset.pattern.permute.xlu0 0
    %224 = vperm.xlu0 %223, %v66
    %v225 = vpop.permute.xlu0 %224
    %v227 = vperm.slane %v34, 0
    %v228 = vmul.f32 %v70, %v227
    %v229 = vmul.f32 %v75, %v227
    %v230 = vmul.f32 %v80, %v227
    %v231 = vmul.f32 %v85, %v227
    %v232 = vmul.f32 %v90, %v227
    %v233 = vmul.f32 %v95, %v227
    %v234 = vmul.f32 %v100, %v227
    %v235 = vmul.f32 %v105, %v227
    %v236 = vmul.f32 %v110, %v227
    %v237 = vmul.f32 %v115, %v227
    %v238 = vmul.f32 %v120, %v227
    %v239 = vmul.f32 %v125, %v227
    %v240 = vmul.f32 %v130, %v227
    %v241 = vmul.f32 %v135, %v227
    %v242 = vmul.f32 %v140, %v227
    %v243 = vmul.f32 %v145, %v227
    %v244 = vmul.f32 %v150, %v227
    %v245 = vmul.f32 %v155, %v227
    %v246 = vmul.f32 %v160, %v227
    %v247 = vmul.f32 %v165, %v227
    %v248 = vmul.f32 %v170, %v227
    %v249 = vmul.f32 %v175, %v227
    %v250 = vmul.f32 %v180, %v227
    %v251 = vmul.f32 %v185, %v227
    %v252 = vmul.f32 %v190, %v227
    %v253 = vmul.f32 %v195, %v227
    %v254 = vmul.f32 %v200, %v227
    %v255 = vmul.f32 %v205, %v227
    %v256 = vmul.f32 %v210, %v227
    %v257 = vmul.f32 %v215, %v227
    %v258 = vmul.f32 %v220, %v227
    %v259 = vmul.f32 %v225, %v227
    %260 = vset.pattern.permute.xlu0 1
    %261 = vperm.xlu0 %260, %v35
    %v262 = vpop.permute.xlu0 %261
    %264 = vset.pattern.permute.xlu0 1
    %265 = vperm.xlu0 %264, %v36
    %v266 = vpop.permute.xlu0 %265
    %268 = vset.pattern.permute.xlu0 1
    %269 = vperm.xlu0 %268, %v37
    %v270 = vpop.permute.xlu0 %269
    %272 = vset.pattern.permute.xlu0 1
    %273 = vperm.xlu0 %272, %v38
    %v274 = vpop.permute.xlu0 %273
    %276 = vset.pattern.permute.xlu0 1
    %277 = vperm.xlu0 %276, %v39
    %v278 = vpop.permute.xlu0 %277
    %280 = vset.pattern.permute.xlu0 1
    %281 = vperm.xlu0 %280, %v40
    %v282 = vpop.permute.xlu0 %281
    %284 = vset.pattern.permute.xlu0 1
    %285 = vperm.xlu0 %284, %v41
    %v286 = vpop.permute.xlu0 %285
    %288 = vset.pattern.permute.xlu0 1
    %289 = vperm.xlu0 %288, %v42
    %v290 = vpop.permute.xlu0 %289
    %292 = vset.pattern.permute.xlu0 1
    %293 = vperm.xlu0 %292, %v43
    %v294 = vpop.permute.xlu0 %293
    %296 = vset.pattern.permute.xlu0 1
    %297 = vperm.xlu0 %296, %v44
    %v298 = vpop.permute.xlu0 %297
    %300 = vset.pattern.permute.xlu0 1
    %301 = vperm.xlu0 %300, %v45
    %v302 = vpop.permute.xlu0 %301
    %304 = vset.pattern.permute.xlu0 1
    %305 = vperm.xlu0 %304, %v46
    %v306 = vpop.permute.xlu0 %305
    %308 = vset.pattern.permute.xlu0 1
    %309 = vperm.xlu0 %308, %v47
    %v310 = vpop.permute.xlu0 %309
    %312 = vset.pattern.permute.xlu0 1
    %313 = vperm.xlu0 %312, %v48
    %v314 = vpop.permute.xlu0 %313
    %316 = vset.pattern.permute.xlu0 1
    %317 = vperm.xlu0 %316, %v49
    %v318 = vpop.permute.xlu0 %317
    %320 = vset.pattern.permute.xlu0 1
    %321 = vperm.xlu0 %320, %v50
    %v322 = vpop.permute.xlu0 %321
    %324 = vset.pattern.permute.xlu0 1
    %325 = vperm.xlu0 %324, %v51
    %v326 = vpop.permute.xlu0 %325
    %328 = vset.pattern.permute.xlu0 1
    %329 = vperm.xlu0 %328, %v52
    %v330 = vpop.permute.xlu0 %329
    %332 = vset.pattern.permute.xlu0 1
    %333 = vperm.xlu0 %332, %v53
    %v334 = vpop.permute.xlu0 %333
    %336 = vset.pattern.permute.xlu0 1
    %337 = vperm.xlu0 %336, %v54
    %v338 = vpop.permute.xlu0 %337
    %340 = vset.pattern.permute.xlu0 1
    %341 = vperm.xlu0 %340, %v55
    %v342 = vpop.permute.xlu0 %341
    %344 = vset.pattern.permute.xlu0 1
    %345 = vperm.xlu0 %344, %v56
    %v346 = vpop.permute.xlu0 %345
    %348 = vset.pattern.permute.xlu0 1
    %349 = vperm.xlu0 %348, %v57
    %v350 = vpop.permute.xlu0 %349
    %352 = vset.pattern.permute.xlu0 1
    %353 = vperm.xlu0 %352, %v58
    %v354 = vpop.permute.xlu0 %353
    %356 = vset.pattern.permute.xlu0 1
    %357 = vperm.xlu0 %356, %v59
    %v358 = vpop.permute.xlu0 %357
    %360 = vset.pattern.permute.xlu0 1
    %361 = vperm.xlu0 %360, %v60
    %v362 = vpop.permute.xlu0 %361
    %364 = vset.pattern.permute.xlu0 1
    %365 = vperm.xlu0 %364, %v61
    %v366 = vpop.permute.xlu0 %365
    %368 = vset.pattern.permute.xlu0 1
    %369 = vperm.xlu0 %368, %v62
    %v370 = vpop.permute.xlu0 %369
    %372 = vset.pattern.permute.xlu0 1
    %373 = vperm.xlu0 %372, %v63
    %v374 = vpop.permute.xlu0 %373
    %376 = vset.pattern.permute.xlu0 1
    %377 = vperm.xlu0 %376, %v64
    %v378 = vpop.permute.xlu0 %377
    %380 = vset.pattern.permute.xlu0 1
    %381 = vperm.xlu0 %380, %v65
    %v382 = vpop.permute.xlu0 %381
    %384 = vset.pattern.permute.xlu0 1
    %385 = vperm.xlu0 %384, %v66
    %v386 = vpop.permute.xlu0 %385
    %v388 = vperm.slane %v34, 1
    %v389 = vmul.f32 %v262, %v388
    %v390 = vmul.f32 %v266, %v388
    %v391 = vmul.f32 %v270, %v388
    %v392 = vmul.f32 %v274, %v388
    %v393 = vmul.f32 %v278, %v388
    %v394 = vmul.f32 %v282, %v388
    %v395 = vmul.f32 %v286, %v388
    %v396 = vmul.f32 %v290, %v388
    %v397 = vmul.f32 %v294, %v388
    %v398 = vmul.f32 %v298, %v388
    %v399 = vmul.f32 %v302, %v388
    %v400 = vmul.f32 %v306, %v388
    %v401 = vmul.f32 %v310, %v388
    %v402 = vmul.f32 %v314, %v388
    %v403 = vmul.f32 %v318, %v388
    %v404 = vmul.f32 %v322, %v388
    %v405 = vmul.f32 %v326, %v388
    %v406 = vmul.f32 %v330, %v388
    %v407 = vmul.f32 %v334, %v388
    %v408 = vmul.f32 %v338, %v388
    %v409 = vmul.f32 %v342, %v388
    %v410 = vmul.f32 %v346, %v388
    %v411 = vmul.f32 %v350, %v388
    %v412 = vmul.f32 %v354, %v388
    %v413 = vmul.f32 %v358, %v388
    %v414 = vmul.f32 %v362, %v388
    %v415 = vmul.f32 %v366, %v388
    %v416 = vmul.f32 %v370, %v388
    %v417 = vmul.f32 %v374, %v388
    %v418 = vmul.f32 %v378, %v388
    %v419 = vmul.f32 %v382, %v388
    %v420 = vmul.f32 %v386, %v388
    %v421 = vadd.f32 %v228, %v389
    %v422 = vadd.f32 %v229, %v390
    %v423 = vadd.f32 %v230, %v391
    %v424 = vadd.f32 %v231, %v392
    %v425 = vadd.f32 %v232, %v393
    %v426 = vadd.f32 %v233, %v394
    %v427 = vadd.f32 %v234, %v395
    %v428 = vadd.f32 %v235, %v396
    %v429 = vadd.f32 %v236, %v397
    %v430 = vadd.f32 %v237, %v398
    %v431 = vadd.f32 %v238, %v399
    %v432 = vadd.f32 %v239, %v400
    %v433 = vadd.f32 %v240, %v401
    %v434 = vadd.f32 %v241, %v402
    %v435 = vadd.f32 %v242, %v403
    %v436 = vadd.f32 %v243, %v404
    %v437 = vadd.f32 %v244, %v405
    %v438 = vadd.f32 %v245, %v406
    %v439 = vadd.f32 %v246, %v407
    %v440 = vadd.f32 %v247, %v408
    %v441 = vadd.f32 %v248, %v409
    %v442 = vadd.f32 %v249, %v410
    %v443 = vadd.f32 %v250, %v411
    %v444 = vadd.f32 %v251, %v412
    %v445 = vadd.f32 %v252, %v413
    %v446 = vadd.f32 %v253, %v414
    %v447 = vadd.f32 %v254, %v415
    %v448 = vadd.f32 %v255, %v416
    %v449 = vadd.f32 %v256, %v417
    %v450 = vadd.f32 %v257, %v418
    %v451 = vadd.f32 %v258, %v419
    %v452 = vadd.f32 %v259, %v420
    %v453 = vld [vmem:[%s2] sm:$0xff]
    %v454 = vld [vmem:[%s2 + $0x8] sm:$0xff]
    %v455 = vld [vmem:[%s2 + $0x10] sm:$0xff]
    %v456 = vld [vmem:[%s2 + $0x18] sm:$0xff]
    %v457 = vld [vmem:[%s2 + $0x20] sm:$0xff]
    %v458 = vld [vmem:[%s2 + $0x28] sm:$0xff]
    %v459 = vld [vmem:[%s2 + $0x30] sm:$0xff]
    %v460 = vld [vmem:[%s2 + $0x38] sm:$0xff]
    %v461 = vld [vmem:[%s2 + $0x40] sm:$0xff]
    %v462 = vld [vmem:[%s2 + $0x48] sm:$0xff]
    %v463 = vld [vmem:[%s2 + $0x50] sm:$0xff]
    %v464 = vld [vmem:[%s2 + $0x58] sm:$0xff]
    %v465 = vld [vmem:[%s2 + $0x60] sm:$0xff]
    %v466 = vld [vmem:[%s2 + $0x68] sm:$0xff]
    %v467 = vld [vmem:[%s2 + $0x70] sm:$0xff]
    %v468 = vld [vmem:[%s2 + $0x78] sm:$0xff]
    %v469 = vld [vmem:[%s2 + $0x80] sm:$0xff]
    %v470 = vld [vmem:[%s2 + $0x88] sm:$0xff]
    %v471 = vld [vmem:[%s2 + $0x90] sm:$0xff]
    %v472 = vld [vmem:[%s2 + $0x98] sm:$0xff]
    %v473 = vld [vmem:[%s2 + $0xa0] sm:$0xff]
    %v474 = vld [vmem:[%s2 + $0xa8] sm:$0xff]
    %v475 = vld [vmem:[%s2 + $0xb0] sm:$0xff]
    %v476 = vld [vmem:[%s2 + $0xb8] sm:$0xff]
    %v477 = vld [vmem:[%s2 + $0xc0] sm:$0xff]
    %v478 = vld [vmem:[%s2 + $0xc8] sm:$0xff]
    %v479 = vld [vmem:[%s2 + $0xd0] sm:$0xff]
    %v480 = vld [vmem:[%s2 + $0xd8] sm:$0xff]
    %v481 = vld [vmem:[%s2 + $0xe0] sm:$0xff]
    %v482 = vld [vmem:[%s2 + $0xe8] sm:$0xff]
    %v483 = vld [vmem:[%s2 + $0xf0] sm:$0xff]
    %v484 = vld [vmem:[%s2 + $0xf8] sm:$0xff]
    %486 = vset.pattern.permute.xlu0 0
    %487 = vperm.xlu0 %486, %v453
    %v488 = vpop.permute.xlu0 %487
    %491 = vset.pattern.permute.xlu0 0
    %492 = vperm.xlu0 %491, %v454
    %v493 = vpop.permute.xlu0 %492
    %496 = vset.pattern.permute.xlu0 0
    %497 = vperm.xlu0 %496, %v455
    %v498 = vpop.permute.xlu0 %497
    %501 = vset.pattern.permute.xlu0 0
    %502 = vperm.xlu0 %501, %v456
    %v503 = vpop.permute.xlu0 %502
    %506 = vset.pattern.permute.xlu0 0
    %507 = vperm.xlu0 %506, %v457
    %v508 = vpop.permute.xlu0 %507
    %511 = vset.pattern.permute.xlu0 0
    %512 = vperm.xlu0 %511, %v458
    %v513 = vpop.permute.xlu0 %512
    %516 = vset.pattern.permute.xlu0 0
    %517 = vperm.xlu0 %516, %v459
    %v518 = vpop.permute.xlu0 %517
    %521 = vset.pattern.permute.xlu0 0
    %522 = vperm.xlu0 %521, %v460
    %v523 = vpop.permute.xlu0 %522
    %526 = vset.pattern.permute.xlu0 0
    %527 = vperm.xlu0 %526, %v461
    %v528 = vpop.permute.xlu0 %527
    %531 = vset.pattern.permute.xlu0 0
    %532 = vperm.xlu0 %531, %v462
    %v533 = vpop.permute.xlu0 %532
    %536 = vset.pattern.permute.xlu0 0
    %537 = vperm.xlu0 %536, %v463
    %v538 = vpop.permute.xlu0 %537
    %541 = vset.pattern.permute.xlu0 0
    %542 = vperm.xlu0 %541, %v464
    %v543 = vpop.permute.xlu0 %542
    %546 = vset.pattern.permute.xlu0 0
    %547 = vperm.xlu0 %546, %v465
    %v548 = vpop.permute.xlu0 %547
    %551 = vset.pattern.permute.xlu0 0
    %552 = vperm.xlu0 %551, %v466
    %v553 = vpop.permute.xlu0 %552
    %556 = vset.pattern.permute.xlu0 0
    %557 = vperm.xlu0 %556, %v467
    %v558 = vpop.permute.xlu0 %557
    %561 = vset.pattern.permute.xlu0 0
    %562 = vperm.xlu0 %561, %v468
    %v563 = vpop.permute.xlu0 %562
    %566 = vset.pattern.permute.xlu0 0
    %567 = vperm.xlu0 %566, %v469
    %v568 = vpop.permute.xlu0 %567
    %571 = vset.pattern.permute.xlu0 0
    %572 = vperm.xlu0 %571, %v470
    %v573 = vpop.permute.xlu0 %572
    %576 = vset.pattern.permute.xlu0 0
    %577 = vperm.xlu0 %576, %v471
    %v578 = vpop.permute.xlu0 %577
    %581 = vset.pattern.permute.xlu0 0
    %582 = vperm.xlu0 %581, %v472
    %v583 = vpop.permute.xlu0 %582
    %586 = vset.pattern.permute.xlu0 0
    %587 = vperm.xlu0 %586, %v473
    %v588 = vpop.permute.xlu0 %587
    %591 = vset.pattern.permute.xlu0 0
    %592 = vperm.xlu0 %591, %v474
    %v593 = vpop.permute.xlu0 %592
    %596 = vset.pattern.permute.xlu0 0
    %597 = vperm.xlu0 %596, %v475
    %v598 = vpop.permute.xlu0 %597
    %601 = vset.pattern.permute.xlu0 0
    %602 = vperm.xlu0 %601, %v476
    %v603 = vpop.permute.xlu0 %602
    %606 = vset.pattern.permute.xlu0 0
    %607 = vperm.xlu0 %606, %v477
    %v608 = vpop.permute.xlu0 %607
    %611 = vset.pattern.permute.xlu0 0
    %612 = vperm.xlu0 %611, %v478
    %v613 = vpop.permute.xlu0 %612
    %616 = vset.pattern.permute.xlu0 0
    %617 = vperm.xlu0 %616, %v479
    %v618 = vpop.permute.xlu0 %617
    %621 = vset.pattern.permute.xlu0 0
    %622 = vperm.xlu0 %621, %v480
    %v623 = vpop.permute.xlu0 %622
    %626 = vset.pattern.permute.xlu0 0
    %627 = vperm.xlu0 %626, %v481
    %v628 = vpop.permute.xlu0 %627
    %631 = vset.pattern.permute.xlu0 0
    %632 = vperm.xlu0 %631, %v482
    %v633 = vpop.permute.xlu0 %632
    %636 = vset.pattern.permute.xlu0 0
    %637 = vperm.xlu0 %636, %v483
    %v638 = vpop.permute.xlu0 %637
    %641 = vset.pattern.permute.xlu0 0
    %642 = vperm.xlu0 %641, %v484
    %v643 = vpop.permute.xlu0 %642
    %v645 = vadd.f32 %v421, %v488
    %v646 = vadd.f32 %v422, %v493
    %v647 = vadd.f32 %v423, %v498
    %v648 = vadd.f32 %v424, %v503
    %v649 = vadd.f32 %v425, %v508
    %v650 = vadd.f32 %v426, %v513
    %v651 = vadd.f32 %v427, %v518
    %v652 = vadd.f32 %v428, %v523
    %v653 = vadd.f32 %v429, %v528
    %v654 = vadd.f32 %v430, %v533
    %v655 = vadd.f32 %v431, %v538
    %v656 = vadd.f32 %v432, %v543
    %v657 = vadd.f32 %v433, %v548
    %v658 = vadd.f32 %v434, %v553
    %v659 = vadd.f32 %v435, %v558
    %v660 = vadd.f32 %v436, %v563
    %v661 = vadd.f32 %v437, %v568
    %v662 = vadd.f32 %v438, %v573
    %v663 = vadd.f32 %v439, %v578
    %v664 = vadd.f32 %v440, %v583
    %v665 = vadd.f32 %v441, %v588
    %v666 = vadd.f32 %v442, %v593
    %v667 = vadd.f32 %v443, %v598
    %v668 = vadd.f32 %v444, %v603
    %v669 = vadd.f32 %v445, %v608
    %v670 = vadd.f32 %v446, %v613
    %v671 = vadd.f32 %v447, %v618
    %v672 = vadd.f32 %v448, %v623
    %v673 = vadd.f32 %v449, %v628
    %v674 = vadd.f32 %v450, %v633
    %v675 = vadd.f32 %v451, %v638
    %v676 = vadd.f32 %v452, %v643
    %vm677 = vcmp.gt.f32.partialorder %v645, 0.0
    %vm678 = vcmp.gt.f32.partialorder %v646, 0.0
    %vm679 = vcmp.gt.f32.partialorder %v647, 0.0
    %vm680 = vcmp.gt.f32.partialorder %v648, 0.0
    %vm681 = vcmp.gt.f32.partialorder %v649, 0.0
    %vm682 = vcmp.gt.f32.partialorder %v650, 0.0
    %vm683 = vcmp.gt.f32.partialorder %v651, 0.0
    %vm684 = vcmp.gt.f32.partialorder %v652, 0.0
    %vm685 = vcmp.gt.f32.partialorder %v653, 0.0
    %vm686 = vcmp.gt.f32.partialorder %v654, 0.0
    %vm687 = vcmp.gt.f32.partialorder %v655, 0.0
    %vm688 = vcmp.gt.f32.partialorder %v656, 0.0
    %vm689 = vcmp.gt.f32.partialorder %v657, 0.0
    %vm690 = vcmp.gt.f32.partialorder %v658, 0.0
    %vm691 = vcmp.gt.f32.partialorder %v659, 0.0
    %vm692 = vcmp.gt.f32.partialorder %v660, 0.0
    %vm693 = vcmp.gt.f32.partialorder %v661, 0.0
    %vm694 = vcmp.gt.f32.partialorder %v662, 0.0
    %vm695 = vcmp.gt.f32.partialorder %v663, 0.0
    %vm696 = vcmp.gt.f32.partialorder %v664, 0.0
    %vm697 = vcmp.gt.f32.partialorder %v665, 0.0
    %vm698 = vcmp.gt.f32.partialorder %v666, 0.0
    %vm699 = vcmp.gt.f32.partialorder %v667, 0.0
    %vm700 = vcmp.gt.f32.partialorder %v668, 0.0
    %vm701 = vcmp.gt.f32.partialorder %v669, 0.0
    %vm702 = vcmp.gt.f32.partialorder %v670, 0.0
    %vm703 = vcmp.gt.f32.partialorder %v671, 0.0
    %vm704 = vcmp.gt.f32.partialorder %v672, 0.0
    %vm705 = vcmp.gt.f32.partialorder %v673, 0.0
    %vm706 = vcmp.gt.f32.partialorder %v674, 0.0
    %vm707 = vcmp.gt.f32.partialorder %v675, 0.0
    %vm708 = vcmp.gt.f32.partialorder %v676, 0.0
    %v709 = vmul.f32 %v645, 0.2
    %v710 = vmul.f32 %v646, 0.2
    %v711 = vmul.f32 %v647, 0.2
    %v712 = vmul.f32 %v648, 0.2
    %v713 = vmul.f32 %v649, 0.2
    %v714 = vmul.f32 %v650, 0.2
    %v715 = vmul.f32 %v651, 0.2
    %v716 = vmul.f32 %v652, 0.2
    %v717 = vmul.f32 %v653, 0.2
    %v718 = vmul.f32 %v654, 0.2
    %v719 = vmul.f32 %v655, 0.2
    %v720 = vmul.f32 %v656, 0.2
    %v721 = vmul.f32 %v657, 0.2
    %v722 = vmul.f32 %v658, 0.2
    %v723 = vmul.f32 %v659, 0.2
    %v724 = vmul.f32 %v660, 0.2
    %v725 = vmul.f32 %v661, 0.2
    %v726 = vmul.f32 %v662, 0.2
    %v727 = vmul.f32 %v663, 0.2
    %v728 = vmul.f32 %v664, 0.2
    %v729 = vmul.f32 %v665, 0.2
    %v730 = vmul.f32 %v666, 0.2
    %v731 = vmul.f32 %v667, 0.2
    %v732 = vmul.f32 %v668, 0.2
    %v733 = vmul.f32 %v669, 0.2
    %v734 = vmul.f32 %v670, 0.2
    %v735 = vmul.f32 %v671, 0.2
    %v736 = vmul.f32 %v672, 0.2
    %v737 = vmul.f32 %v673, 0.2
    %v738 = vmul.f32 %v674, 0.2
    %v739 = vmul.f32 %v675, 0.2
    %v740 = vmul.f32 %v676, 0.2
    %v741 = vsel %vm677, %v645, %v709
    %v742 = vsel %vm678, %v646, %v710
    %v743 = vsel %vm679, %v647, %v711
    %v744 = vsel %vm680, %v648, %v712
    %v745 = vsel %vm681, %v649, %v713
    %v746 = vsel %vm682, %v650, %v714
    %v747 = vsel %vm683, %v651, %v715
    %v748 = vsel %vm684, %v652, %v716
    %v749 = vsel %vm685, %v653, %v717
    %v750 = vsel %vm686, %v654, %v718
    %v751 = vsel %vm687, %v655, %v719
    %v752 = vsel %vm688, %v656, %v720
    %v753 = vsel %vm689, %v657, %v721
    %v754 = vsel %vm690, %v658, %v722
    %v755 = vsel %vm691, %v659, %v723
    %v756 = vsel %vm692, %v660, %v724
    %v757 = vsel %vm693, %v661, %v725
    %v758 = vsel %vm694, %v662, %v726
    %v759 = vsel %vm695, %v663, %v727
    %v760 = vsel %vm696, %v664, %v728
    %v761 = vsel %vm697, %v665, %v729
    %v762 = vsel %vm698, %v666, %v730
    %v763 = vsel %vm699, %v667, %v731
    %v764 = vsel %vm700, %v668, %v732
    %v765 = vsel %vm701, %v669, %v733
    %v766 = vsel %vm702, %v670, %v734
    %v767 = vsel %vm703, %v671, %v735
    %v768 = vsel %vm704, %v672, %v736
    %v769 = vsel %vm705, %v673, %v737
    %v770 = vsel %vm706, %v674, %v738
    %v771 = vsel %vm707, %v675, %v739
    %v772 = vsel %vm708, %v676, %v740
    %v773 = vpack.c.bf16 %v742, %v741
    %v774 = vpack.c.bf16 %v744, %v743
    %v775 = vpack.c.bf16 %v746, %v745
    %v776 = vpack.c.bf16 %v748, %v747
    %v777 = vpack.c.bf16 %v750, %v749
    %v778 = vpack.c.bf16 %v752, %v751
    %v779 = vpack.c.bf16 %v754, %v753
    %v780 = vpack.c.bf16 %v756, %v755
    %v781 = vpack.c.bf16 %v758, %v757
    %v782 = vpack.c.bf16 %v760, %v759
    %v783 = vpack.c.bf16 %v762, %v761
    %v784 = vpack.c.bf16 %v764, %v763
    %v785 = vpack.c.bf16 %v766, %v765
    %v786 = vpack.c.bf16 %v768, %v767
    %v787 = vpack.c.bf16 %v770, %v769
    %v788 = vpack.c.bf16 %v772, %v771
    %v789 = vld [vmem:[%s3] sm:$0xff]
    %v790 = vld [vmem:[%s3 + $0x8] sm:$0xff]
    %v791 = vld [vmem:[%s3 + $0x10] sm:$0xff]
    %v792 = vld [vmem:[%s3 + $0x18] sm:$0xff]
    %v793 = vld [vmem:[%s3 + $0x20] sm:$0xff]
    %v794 = vld [vmem:[%s3 + $0x28] sm:$0xff]
    %v795 = vld [vmem:[%s3 + $0x30] sm:$0xff]
    %v796 = vld [vmem:[%s3 + $0x38] sm:$0xff]
    %v797 = vld [vmem:[%s3 + $0x40] sm:$0xff]
    %v798 = vld [vmem:[%s3 + $0x48] sm:$0xff]
    %v799 = vld [vmem:[%s3 + $0x50] sm:$0xff]
    %v800 = vld [vmem:[%s3 + $0x58] sm:$0xff]
    %v801 = vld [vmem:[%s3 + $0x60] sm:$0xff]
    %v802 = vld [vmem:[%s3 + $0x68] sm:$0xff]
    %v803 = vld [vmem:[%s3 + $0x70] sm:$0xff]
    %v804 = vld [vmem:[%s3 + $0x78] sm:$0xff]
    %v805 = vld [vmem:[%s3 + $0x80] sm:$0xff]
    %v806 = vld [vmem:[%s3 + $0x88] sm:$0xff]
    %v807 = vld [vmem:[%s3 + $0x90] sm:$0xff]
    %v808 = vld [vmem:[%s3 + $0x98] sm:$0xff]
    %v809 = vld [vmem:[%s3 + $0xa0] sm:$0xff]
    %v810 = vld [vmem:[%s3 + $0xa8] sm:$0xff]
    %v811 = vld [vmem:[%s3 + $0xb0] sm:$0xff]
    %v812 = vld [vmem:[%s3 + $0xb8] sm:$0xff]
    %v813 = vld [vmem:[%s3 + $0xc0] sm:$0xff]
    %v814 = vld [vmem:[%s3 + $0xc8] sm:$0xff]
    %v815 = vld [vmem:[%s3 + $0xd0] sm:$0xff]
    %v816 = vld [vmem:[%s3 + $0xd8] sm:$0xff]
    %v817 = vld [vmem:[%s3 + $0xe0] sm:$0xff]
    %v818 = vld [vmem:[%s3 + $0xe8] sm:$0xff]
    %v819 = vld [vmem:[%s3 + $0xf0] sm:$0xff]
    %v820 = vld [vmem:[%s3 + $0xf8] sm:$0xff]
    %v853 = vunpack.c.l.b16 %v789
    %v854 = vunpack.c.h.b16 %v789
    %v855 = vunpack.c.l.b16 %v790
    %v856 = vunpack.c.h.b16 %v790
    %v857 = vunpack.c.l.b16 %v791
    %v858 = vunpack.c.h.b16 %v791
    %v859 = vunpack.c.l.b16 %v792
    %v860 = vunpack.c.h.b16 %v792
    %v861 = vunpack.c.l.b16 %v793
    %v862 = vunpack.c.h.b16 %v793
    %v863 = vunpack.c.l.b16 %v794
    %v864 = vunpack.c.h.b16 %v794
    %v865 = vunpack.c.l.b16 %v795
    %v866 = vunpack.c.h.b16 %v795
    %v867 = vunpack.c.l.b16 %v796
    %v868 = vunpack.c.h.b16 %v796
    %v869 = vunpack.c.l.b16 %v797
    %v870 = vunpack.c.h.b16 %v797
    %v871 = vunpack.c.l.b16 %v798
    %v872 = vunpack.c.h.b16 %v798
    %v873 = vunpack.c.l.b16 %v799
    %v874 = vunpack.c.h.b16 %v799
    %v875 = vunpack.c.l.b16 %v800
    %v876 = vunpack.c.h.b16 %v800
    %v877 = vunpack.c.l.b16 %v801
    %v878 = vunpack.c.h.b16 %v801
    %v879 = vunpack.c.l.b16 %v802
    %v880 = vunpack.c.h.b16 %v802
    %v881 = vunpack.c.l.b16 %v803
    %v882 = vunpack.c.h.b16 %v803
    %v883 = vunpack.c.l.b16 %v804
    %v884 = vunpack.c.h.b16 %v804
    %v885 = vunpack.c.l.b16 %v805
    %v886 = vunpack.c.h.b16 %v805
    %v887 = vunpack.c.l.b16 %v806
    %v888 = vunpack.c.h.b16 %v806
    %v889 = vunpack.c.l.b16 %v807
    %v890 = vunpack.c.h.b16 %v807
    %v891 = vunpack.c.l.b16 %v808
    %v892 = vunpack.c.h.b16 %v808
    %v893 = vunpack.c.l.b16 %v809
    %v894 = vunpack.c.h.b16 %v809
    %v895 = vunpack.c.l.b16 %v810
    %v896 = vunpack.c.h.b16 %v810
    %v897 = vunpack.c.l.b16 %v811
    %v898 = vunpack.c.h.b16 %v811
    %v899 = vunpack.c.l.b16 %v812
    %v900 = vunpack.c.h.b16 %v812
    %v901 = vunpack.c.l.b16 %v813
    %v902 = vunpack.c.h.b16 %v813
    %v903 = vunpack.c.l.b16 %v814
    %v904 = vunpack.c.h.b16 %v814
    %v905 = vunpack.c.l.b16 %v815
    %v906 = vunpack.c.h.b16 %v815
    %v907 = vunpack.c.l.b16 %v816
    %v908 = vunpack.c.h.b16 %v816
    %v909 = vunpack.c.l.b16 %v817
    %v910 = vunpack.c.h.b16 %v817
    %v911 = vunpack.c.l.b16 %v818
    %v912 = vunpack.c.h.b16 %v818
    %v913 = vunpack.c.l.b16 %v819
    %v914 = vunpack.c.h.b16 %v819
    %v915 = vunpack.c.l.b16 %v820
    %v916 = vunpack.c.h.b16 %v820
    %v917 = vpack.c.b16 %v855, %v853
    %v918 = vpack.c.b16 %v856, %v854
    %v919 = vpack.c.b16 %v859, %v857
    %v920 = vpack.c.b16 %v860, %v858
    %v921 = vpack.c.b16 %v863, %v861
    %v922 = vpack.c.b16 %v864, %v862
    %v923 = vpack.c.b16 %v867, %v865
    %v924 = vpack.c.b16 %v868, %v866
    %v925 = vpack.c.b16 %v871, %v869
    %v926 = vpack.c.b16 %v872, %v870
    %v927 = vpack.c.b16 %v875, %v873
    %v928 = vpack.c.b16 %v876, %v874
    %v929 = vpack.c.b16 %v879, %v877
    %v930 = vpack.c.b16 %v880, %v878
    %v931 = vpack.c.b16 %v883, %v881
    %v932 = vpack.c.b16 %v884, %v882
    %v933 = vpack.c.b16 %v887, %v885
    %v934 = vpack.c.b16 %v888, %v886
    %v935 = vpack.c.b16 %v891, %v889
    %v936 = vpack.c.b16 %v892, %v890
    %v937 = vpack.c.b16 %v895, %v893
    %v938 = vpack.c.b16 %v896, %v894
    %v939 = vpack.c.b16 %v899, %v897
    %v940 = vpack.c.b16 %v900, %v898
    %v941 = vpack.c.b16 %v903, %v901
    %v942 = vpack.c.b16 %v904, %v902
    %v943 = vpack.c.b16 %v907, %v905
    %v944 = vpack.c.b16 %v908, %v906
    %v945 = vpack.c.b16 %v911, %v909
    %v946 = vpack.c.b16 %v912, %v910
    %v947 = vpack.c.b16 %v915, %v913
    %v948 = vpack.c.b16 %v916, %v914
    %981 = vmatpush.bf16.msra.mxu0 %v780
    %982 = vmatpush.bf16.msra.mxu0 %v779
    %983 = vmatpush.bf16.msra.mxu0 %v778
    %984 = vmatpush.bf16.msra.mxu0 %v777
    %985 = vmatpush.bf16.msra.mxu0 %v776
    %986 = vmatpush.bf16.msra.mxu0 %v775
    %987 = vmatpush.bf16.msra.mxu0 %v774
    %988 = vmatpush.bf16.msra.mxu0 %v773
    %989 = vmatmul.bf16.gmra.mxu0 %v917
    %v990 = vpop.f32.mrf.mxu0
    %v991 = vadd.f32 0.0, %v990
    %v992 = vpop.f32.mrf.mxu0
    %v993 = vadd.f32 0.0, %v992
    %994 = vmatmul.bf16.gmra.mxu0 %v919
    %v995 = vpop.f32.mrf.mxu0
    %v996 = vadd.f32 0.0, %v995
    %v997 = vpop.f32.mrf.mxu0
    %v998 = vadd.f32 0.0, %v997
    %999 = vmatmul.bf16.gmra.mxu0 %v921
    %v1000 = vpop.f32.mrf.mxu0
    %v1001 = vadd.f32 0.0, %v1000
    %v1002 = vpop.f32.mrf.mxu0
    %v1003 = vadd.f32 0.0, %v1002
    %1004 = vmatmul.bf16.gmra.mxu0 %v923
    %v1005 = vpop.f32.mrf.mxu0
    %v1006 = vadd.f32 0.0, %v1005
    %v1007 = vpop.f32.mrf.mxu0
    %v1008 = vadd.f32 0.0, %v1007
    %1009 = vmatmul.bf16.gmra.mxu0 %v925
    %v1010 = vpop.f32.mrf.mxu0
    %v1011 = vadd.f32 0.0, %v1010
    %v1012 = vpop.f32.mrf.mxu0
    %v1013 = vadd.f32 0.0, %v1012
    %1014 = vmatmul.bf16.gmra.mxu0 %v927
    %v1015 = vpop.f32.mrf.mxu0
    %v1016 = vadd.f32 0.0, %v1015
    %v1017 = vpop.f32.mrf.mxu0
    %v1018 = vadd.f32 0.0, %v1017
    %1019 = vmatmul.bf16.gmra.mxu0 %v929
    %v1020 = vpop.f32.mrf.mxu0
    %v1021 = vadd.f32 0.0, %v1020
    %v1022 = vpop.f32.mrf.mxu0
    %v1023 = vadd.f32 0.0, %v1022
    %1024 = vmatmul.bf16.gmra.mxu0 %v931
    %v1025 = vpop.f32.mrf.mxu0
    %v1026 = vadd.f32 0.0, %v1025
    %v1027 = vpop.f32.mrf.mxu0
    %v1028 = vadd.f32 0.0, %v1027
    %1029 = vmatmul.bf16.gmra.mxu0 %v933
    %v1030 = vpop.f32.mrf.mxu0
    %v1031 = vadd.f32 0.0, %v1030
    %v1032 = vpop.f32.mrf.mxu0
    %v1033 = vadd.f32 0.0, %v1032
    %1034 = vmatmul.bf16.gmra.mxu0 %v935
    %v1035 = vpop.f32.mrf.mxu0
    %v1036 = vadd.f32 0.0, %v1035
    %v1037 = vpop.f32.mrf.mxu0
    %v1038 = vadd.f32 0.0, %v1037
    %1039 = vmatmul.bf16.gmra.mxu0 %v937
    %v1040 = vpop.f32.mrf.mxu0
    %v1041 = vadd.f32 0.0, %v1040
    %v1042 = vpop.f32.mrf.mxu0
    %v1043 = vadd.f32 0.0, %v1042
    %1044 = vmatmul.bf16.gmra.mxu0 %v939
    %v1045 = vpop.f32.mrf.mxu0
    %v1046 = vadd.f32 0.0, %v1045
    %v1047 = vpop.f32.mrf.mxu0
    %v1048 = vadd.f32 0.0, %v1047
    %1049 = vmatmul.bf16.gmra.mxu0 %v941
    %v1050 = vpop.f32.mrf.mxu0
    %v1051 = vadd.f32 0.0, %v1050
    %v1052 = vpop.f32.mrf.mxu0
    %v1053 = vadd.f32 0.0, %v1052
    %1054 = vmatmul.bf16.gmra.mxu0 %v943
    %v1055 = vpop.f32.mrf.mxu0
    %v1056 = vadd.f32 0.0, %v1055
    %v1057 = vpop.f32.mrf.mxu0
    %v1058 = vadd.f32 0.0, %v1057
    %1059 = vmatmul.bf16.gmra.mxu0 %v945
    %v1060 = vpop.f32.mrf.mxu0
    %v1061 = vadd.f32 0.0, %v1060
    %v1062 = vpop.f32.mrf.mxu0
    %v1063 = vadd.f32 0.0, %v1062
    %1064 = vmatmul.bf16.gmra.mxu0 %v947
    %v1065 = vpop.f32.mrf.mxu0
    %v1066 = vadd.f32 0.0, %v1065
    %v1067 = vpop.f32.mrf.mxu0
    %v1068 = vadd.f32 0.0, %v1067
    %1069 = vdwg.mxu0
    %1070 = vmatpush.bf16.msra.mxu0 %v788
    %1071 = vmatpush.bf16.msra.mxu0 %v787
    %1072 = vmatpush.bf16.msra.mxu0 %v786
    %1073 = vmatpush.bf16.msra.mxu0 %v785
    %1074 = vmatpush.bf16.msra.mxu0 %v784
    %1075 = vmatpush.bf16.msra.mxu0 %v783
    %1076 = vmatpush.bf16.msra.mxu0 %v782
    %1077 = vmatpush.bf16.msra.mxu0 %v781
    %1078 = vmatmul.bf16.gmra.mxu0 %v918
    %v1079 = vpop.f32.mrf.mxu0
    %v1080 = vadd.f32 %v991, %v1079
    %v1081 = vpop.f32.mrf.mxu0
    %v1082 = vadd.f32 %v993, %v1081
    %1083 = vmatmul.bf16.gmra.mxu0 %v920
    %v1084 = vpop.f32.mrf.mxu0
    %v1085 = vadd.f32 %v996, %v1084
    %v1086 = vpop.f32.mrf.mxu0
    %v1087 = vadd.f32 %v998, %v1086
    %1088 = vmatmul.bf16.gmra.mxu0 %v922
    %v1089 = vpop.f32.mrf.mxu0
    %v1090 = vadd.f32 %v1001, %v1089
    %v1091 = vpop.f32.mrf.mxu0
    %v1092 = vadd.f32 %v1003, %v1091
    %1093 = vmatmul.bf16.gmra.mxu0 %v924
    %v1094 = vpop.f32.mrf.mxu0
    %v1095 = vadd.f32 %v1006, %v1094
    %v1096 = vpop.f32.mrf.mxu0
    %v1097 = vadd.f32 %v1008, %v1096
    %1098 = vmatmul.bf16.gmra.mxu0 %v926
    %v1099 = vpop.f32.mrf.mxu0
    %v1100 = vadd.f32 %v1011, %v1099
    %v1101 = vpop.f32.mrf.mxu0
    %v1102 = vadd.f32 %v1013, %v1101
    %1103 = vmatmul.bf16.gmra.mxu0 %v928
    %v1104 = vpop.f32.mrf.mxu0
    %v1105 = vadd.f32 %v1016, %v1104
    %v1106 = vpop.f32.mrf.mxu0
    %v1107 = vadd.f32 %v1018, %v1106
    %1108 = vmatmul.bf16.gmra.mxu0 %v930
    %v1109 = vpop.f32.mrf.mxu0
    %v1110 = vadd.f32 %v1021, %v1109
    %v1111 = vpop.f32.mrf.mxu0
    %v1112 = vadd.f32 %v1023, %v1111
    %1113 = vmatmul.bf16.gmra.mxu0 %v932
    %v1114 = vpop.f32.mrf.mxu0
    %v1115 = vadd.f32 %v1026, %v1114
    %v1116 = vpop.f32.mrf.mxu0
    %v1117 = vadd.f32 %v1028, %v1116
    %1118 = vmatmul.bf16.gmra.mxu0 %v934
    %v1119 = vpop.f32.mrf.mxu0
    %v1120 = vadd.f32 %v1031, %v1119
    %v1121 = vpop.f32.mrf.mxu0
    %v1122 = vadd.f32 %v1033, %v1121
    %1123 = vmatmul.bf16.gmra.mxu0 %v936
    %v1124 = vpop.f32.mrf.mxu0
    %v1125 = vadd.f32 %v1036, %v1124
    %v1126 = vpop.f32.mrf.mxu0
    %v1127 = vadd.f32 %v1038, %v1126
    %1128 = vmatmul.bf16.gmra.mxu0 %v938
    %v1129 = vpop.f32.mrf.mxu0
    %v1130 = vadd.f32 %v1041, %v1129
    %v1131 = vpop.f32.mrf.mxu0
    %v1132 = vadd.f32 %v1043, %v1131
    %1133 = vmatmul.bf16.gmra.mxu0 %v940
    %v1134 = vpop.f32.mrf.mxu0
    %v1135 = vadd.f32 %v1046, %v1134
    %v1136 = vpop.f32.mrf.mxu0
    %v1137 = vadd.f32 %v1048, %v1136
    %1138 = vmatmul.bf16.gmra.mxu0 %v942
    %v1139 = vpop.f32.mrf.mxu0
    %v1140 = vadd.f32 %v1051, %v1139
    %v1141 = vpop.f32.mrf.mxu0
    %v1142 = vadd.f32 %v1053, %v1141
    %1143 = vmatmul.bf16.gmra.mxu0 %v944
    %v1144 = vpop.f32.mrf.mxu0
    %v1145 = vadd.f32 %v1056, %v1144
    %v1146 = vpop.f32.mrf.mxu0
    %v1147 = vadd.f32 %v1058, %v1146
    %1148 = vmatmul.bf16.gmra.mxu0 %v946
    %v1149 = vpop.f32.mrf.mxu0
    %v1150 = vadd.f32 %v1061, %v1149
    %v1151 = vpop.f32.mrf.mxu0
    %v1152 = vadd.f32 %v1063, %v1151
    %1153 = vmatmul.bf16.gmra.mxu0 %v948
    %v1154 = vpop.f32.mrf.mxu0
    %v1155 = vadd.f32 %v1066, %v1154
    %v1156 = vpop.f32.mrf.mxu0
    %v1157 = vadd.f32 %v1068, %v1156
    %1158 = vdwg.mxu0
    %v1159 = vpack.c.bf16 %v1080, %v1080
    %v1160 = vpack.c.bf16 %v1082, %v1082
    %v1161 = vpack.c.bf16 %v1085, %v1085
    %v1162 = vpack.c.bf16 %v1087, %v1087
    %v1163 = vpack.c.bf16 %v1090, %v1090
    %v1164 = vpack.c.bf16 %v1092, %v1092
    %v1165 = vpack.c.bf16 %v1095, %v1095
    %v1166 = vpack.c.bf16 %v1097, %v1097
    %v1167 = vpack.c.bf16 %v1100, %v1100
    %v1168 = vpack.c.bf16 %v1102, %v1102
    %v1169 = vpack.c.bf16 %v1105, %v1105
    %v1170 = vpack.c.bf16 %v1107, %v1107
    %v1171 = vpack.c.bf16 %v1110, %v1110
    %v1172 = vpack.c.bf16 %v1112, %v1112
    %v1173 = vpack.c.bf16 %v1115, %v1115
    %v1174 = vpack.c.bf16 %v1117, %v1117
    %v1175 = vpack.c.bf16 %v1120, %v1120
    %v1176 = vpack.c.bf16 %v1122, %v1122
    %v1177 = vpack.c.bf16 %v1125, %v1125
    %v1178 = vpack.c.bf16 %v1127, %v1127
    %v1179 = vpack.c.bf16 %v1130, %v1130
    %v1180 = vpack.c.bf16 %v1132, %v1132
    %v1181 = vpack.c.bf16 %v1135, %v1135
    %v1182 = vpack.c.bf16 %v1137, %v1137
    %v1183 = vpack.c.bf16 %v1140, %v1140
    %v1184 = vpack.c.bf16 %v1142, %v1142
    %v1185 = vpack.c.bf16 %v1145, %v1145
    %v1186 = vpack.c.bf16 %v1147, %v1147
    %v1187 = vpack.c.bf16 %v1150, %v1150
    %v1188 = vpack.c.bf16 %v1152, %v1152
    %v1189 = vpack.c.bf16 %v1155, %v1155
    %v1190 = vpack.c.bf16 %v1157, %v1157
    %v1191 = vld [vmem:[%s4] sm:$0xf]
    %v1192 = vld [vmem:[%s4 + $0x4] sm:$0xf]
    %v1193 = vld [vmem:[%s4 + $0x8] sm:$0xf]
    %v1194 = vld [vmem:[%s4 + $0xc] sm:$0xf]
    %v1195 = vld [vmem:[%s4 + $0x10] sm:$0xf]
    %v1196 = vld [vmem:[%s4 + $0x14] sm:$0xf]
    %v1197 = vld [vmem:[%s4 + $0x18] sm:$0xf]
    %v1198 = vld [vmem:[%s4 + $0x1c] sm:$0xf]
    %v1199 = vld [vmem:[%s4 + $0x20] sm:$0xf]
    %v1200 = vld [vmem:[%s4 + $0x24] sm:$0xf]
    %v1201 = vld [vmem:[%s4 + $0x28] sm:$0xf]
    %v1202 = vld [vmem:[%s4 + $0x2c] sm:$0xf]
    %v1203 = vld [vmem:[%s4 + $0x30] sm:$0xf]
    %v1204 = vld [vmem:[%s4 + $0x34] sm:$0xf]
    %v1205 = vld [vmem:[%s4 + $0x38] sm:$0xf]
    %v1206 = vld [vmem:[%s4 + $0x3c] sm:$0xf]
    %v1207 = vld [vmem:[%s4 + $0x40] sm:$0xf]
    %v1208 = vld [vmem:[%s4 + $0x44] sm:$0xf]
    %v1209 = vld [vmem:[%s4 + $0x48] sm:$0xf]
    %v1210 = vld [vmem:[%s4 + $0x4c] sm:$0xf]
    %v1211 = vld [vmem:[%s4 + $0x50] sm:$0xf]
    %v1212 = vld [vmem:[%s4 + $0x54] sm:$0xf]
    %v1213 = vld [vmem:[%s4 + $0x58] sm:$0xf]
    %v1214 = vld [vmem:[%s4 + $0x5c] sm:$0xf]
    %v1215 = vld [vmem:[%s4 + $0x60] sm:$0xf]
    %v1216 = vld [vmem:[%s4 + $0x64] sm:$0xf]
    %v1217 = vld [vmem:[%s4 + $0x68] sm:$0xf]
    %v1218 = vld [vmem:[%s4 + $0x6c] sm:$0xf]
    %v1219 = vld [vmem:[%s4 + $0x70] sm:$0xf]
    %v1220 = vld [vmem:[%s4 + $0x74] sm:$0xf]
    %v1221 = vld [vmem:[%s4 + $0x78] sm:$0xf]
    %v1222 = vld [vmem:[%s4 + $0x7c] sm:$0xf]
    %1224 = vset.pattern.permute.xlu0 0
    %1225 = vperm.xlu0 %1224, %v1191
    %v1226 = vpop.permute.xlu0 %1225
    %v1229 = vunpack.c.l.s4 839922192
    %v1230 = vunpack.c.0.s8 %v1229
    %v1231 = vperm.slane %v1226, %v1230
    %1233 = vset.pattern.permute.xlu0 0
    %1234 = vperm.xlu0 %1233, %v1192
    %v1235 = vpop.permute.xlu0 %1234
    %v1238 = vunpack.c.l.s4 839922192
    %v1239 = vunpack.c.0.s8 %v1238
    %v1240 = vperm.slane %v1235, %v1239
    %1242 = vset.pattern.permute.xlu0 0
    %1243 = vperm.xlu0 %1242, %v1193
    %v1244 = vpop.permute.xlu0 %1243
    %v1247 = vunpack.c.l.s4 839922192
    %v1248 = vunpack.c.0.s8 %v1247
    %v1249 = vperm.slane %v1244, %v1248
    %1251 = vset.pattern.permute.xlu0 0
    %1252 = vperm.xlu0 %1251, %v1194
    %v1253 = vpop.permute.xlu0 %1252
    %v1256 = vunpack.c.l.s4 839922192
    %v1257 = vunpack.c.0.s8 %v1256
    %v1258 = vperm.slane %v1253, %v1257
    %1260 = vset.pattern.permute.xlu0 0
    %1261 = vperm.xlu0 %1260, %v1195
    %v1262 = vpop.permute.xlu0 %1261
    %v1265 = vunpack.c.l.s4 839922192
    %v1266 = vunpack.c.0.s8 %v1265
    %v1267 = vperm.slane %v1262, %v1266
    %1269 = vset.pattern.permute.xlu0 0
    %1270 = vperm.xlu0 %1269, %v1196
    %v1271 = vpop.permute.xlu0 %1270
    %v1274 = vunpack.c.l.s4 839922192
    %v1275 = vunpack.c.0.s8 %v1274
    %v1276 = vperm.slane %v1271, %v1275
    %1278 = vset.pattern.permute.xlu0 0
    %1279 = vperm.xlu0 %1278, %v1197
    %v1280 = vpop.permute.xlu0 %1279
    %v1283 = vunpack.c.l.s4 839922192
    %v1284 = vunpack.c.0.s8 %v1283
    %v1285 = vperm.slane %v1280, %v1284
    %1287 = vset.pattern.permute.xlu0 0
    %1288 = vperm.xlu0 %1287, %v1198
    %v1289 = vpop.permute.xlu0 %1288
    %v1292 = vunpack.c.l.s4 839922192
    %v1293 = vunpack.c.0.s8 %v1292
    %v1294 = vperm.slane %v1289, %v1293
    %1296 = vset.pattern.permute.xlu0 0
    %1297 = vperm.xlu0 %1296, %v1199
    %v1298 = vpop.permute.xlu0 %1297
    %v1301 = vunpack.c.l.s4 839922192
    %v1302 = vunpack.c.0.s8 %v1301
    %v1303 = vperm.slane %v1298, %v1302
    %1305 = vset.pattern.permute.xlu0 0
    %1306 = vperm.xlu0 %1305, %v1200
    %v1307 = vpop.permute.xlu0 %1306
    %v1310 = vunpack.c.l.s4 839922192
    %v1311 = vunpack.c.0.s8 %v1310
    %v1312 = vperm.slane %v1307, %v1311
    %1314 = vset.pattern.permute.xlu0 0
    %1315 = vperm.xlu0 %1314, %v1201
    %v1316 = vpop.permute.xlu0 %1315
    %v1319 = vunpack.c.l.s4 839922192
    %v1320 = vunpack.c.0.s8 %v1319
    %v1321 = vperm.slane %v1316, %v1320
    %1323 = vset.pattern.permute.xlu0 0
    %1324 = vperm.xlu0 %1323, %v1202
    %v1325 = vpop.permute.xlu0 %1324
    %v1328 = vunpack.c.l.s4 839922192
    %v1329 = vunpack.c.0.s8 %v1328
    %v1330 = vperm.slane %v1325, %v1329
    %1332 = vset.pattern.permute.xlu0 0
    %1333 = vperm.xlu0 %1332, %v1203
    %v1334 = vpop.permute.xlu0 %1333
    %v1337 = vunpack.c.l.s4 839922192
    %v1338 = vunpack.c.0.s8 %v1337
    %v1339 = vperm.slane %v1334, %v1338
    %1341 = vset.pattern.permute.xlu0 0
    %1342 = vperm.xlu0 %1341, %v1204
    %v1343 = vpop.permute.xlu0 %1342
    %v1346 = vunpack.c.l.s4 839922192
    %v1347 = vunpack.c.0.s8 %v1346
    %v1348 = vperm.slane %v1343, %v1347
    %1350 = vset.pattern.permute.xlu0 0
    %1351 = vperm.xlu0 %1350, %v1205
    %v1352 = vpop.permute.xlu0 %1351
    %v1355 = vunpack.c.l.s4 839922192
    %v1356 = vunpack.c.0.s8 %v1355
    %v1357 = vperm.slane %v1352, %v1356
    %1359 = vset.pattern.permute.xlu0 0
    %1360 = vperm.xlu0 %1359, %v1206
    %v1361 = vpop.permute.xlu0 %1360
    %v1364 = vunpack.c.l.s4 839922192
    %v1365 = vunpack.c.0.s8 %v1364
    %v1366 = vperm.slane %v1361, %v1365
    %1368 = vset.pattern.permute.xlu0 0
    %1369 = vperm.xlu0 %1368, %v1207
    %v1370 = vpop.permute.xlu0 %1369
    %v1373 = vunpack.c.l.s4 839922192
    %v1374 = vunpack.c.0.s8 %v1373
    %v1375 = vperm.slane %v1370, %v1374
    %1377 = vset.pattern.permute.xlu0 0
    %1378 = vperm.xlu0 %1377, %v1208
    %v1379 = vpop.permute.xlu0 %1378
    %v1382 = vunpack.c.l.s4 839922192
    %v1383 = vunpack.c.0.s8 %v1382
    %v1384 = vperm.slane %v1379, %v1383
    %1386 = vset.pattern.permute.xlu0 0
    %1387 = vperm.xlu0 %1386, %v1209
    %v1388 = vpop.permute.xlu0 %1387
    %v1391 = vunpack.c.l.s4 839922192
    %v1392 = vunpack.c.0.s8 %v1391
    %v1393 = vperm.slane %v1388, %v1392
    %1395 = vset.pattern.permute.xlu0 0
    %1396 = vperm.xlu0 %1395, %v1210
    %v1397 = vpop.permute.xlu0 %1396
    %v1400 = vunpack.c.l.s4 839922192
    %v1401 = vunpack.c.0.s8 %v1400
    %v1402 = vperm.slane %v1397, %v1401
    %1404 = vset.pattern.permute.xlu0 0
    %1405 = vperm.xlu0 %1404, %v1211
    %v1406 = vpop.permute.xlu0 %1405
    %v1409 = vunpack.c.l.s4 839922192
    %v1410 = vunpack.c.0.s8 %v1409
    %v1411 = vperm.slane %v1406, %v1410
    %1413 = vset.pattern.permute.xlu0 0
    %1414 = vperm.xlu0 %1413, %v1212
    %v1415 = vpop.permute.xlu0 %1414
    %v1418 = vunpack.c.l.s4 839922192
    %v1419 = vunpack.c.0.s8 %v1418
    %v1420 = vperm.slane %v1415, %v1419
    %1422 = vset.pattern.permute.xlu0 0
    %1423 = vperm.xlu0 %1422, %v1213
    %v1424 = vpop.permute.xlu0 %1423
    %v1427 = vunpack.c.l.s4 839922192
    %v1428 = vunpack.c.0.s8 %v1427
    %v1429 = vperm.slane %v1424, %v1428
    %1431 = vset.pattern.permute.xlu0 0
    %1432 = vperm.xlu0 %1431, %v1214
    %v1433 = vpop.permute.xlu0 %1432
    %v1436 = vunpack.c.l.s4 839922192
    %v1437 = vunpack.c.0.s8 %v1436
    %v1438 = vperm.slane %v1433, %v1437
    %1440 = vset.pattern.permute.xlu0 0
    %1441 = vperm.xlu0 %1440, %v1215
    %v1442 = vpop.permute.xlu0 %1441
    %v1445 = vunpack.c.l.s4 839922192
    %v1446 = vunpack.c.0.s8 %v1445
    %v1447 = vperm.slane %v1442, %v1446
    %1449 = vset.pattern.permute.xlu0 0
    %1450 = vperm.xlu0 %1449, %v1216
    %v1451 = vpop.permute.xlu0 %1450
    %v1454 = vunpack.c.l.s4 839922192
    %v1455 = vunpack.c.0.s8 %v1454
    %v1456 = vperm.slane %v1451, %v1455
    %1458 = vset.pattern.permute.xlu0 0
    %1459 = vperm.xlu0 %1458, %v1217
    %v1460 = vpop.permute.xlu0 %1459
    %v1463 = vunpack.c.l.s4 839922192
    %v1464 = vunpack.c.0.s8 %v1463
    %v1465 = vperm.slane %v1460, %v1464
    %1467 = vset.pattern.permute.xlu0 0
    %1468 = vperm.xlu0 %1467, %v1218
    %v1469 = vpop.permute.xlu0 %1468
    %v1472 = vunpack.c.l.s4 839922192
    %v1473 = vunpack.c.0.s8 %v1472
    %v1474 = vperm.slane %v1469, %v1473
    %1476 = vset.pattern.permute.xlu0 0
    %1477 = vperm.xlu0 %1476, %v1219
    %v1478 = vpop.permute.xlu0 %1477
    %v1481 = vunpack.c.l.s4 839922192
    %v1482 = vunpack.c.0.s8 %v1481
    %v1483 = vperm.slane %v1478, %v1482
    %1485 = vset.pattern.permute.xlu0 0
    %1486 = vperm.xlu0 %1485, %v1220
    %v1487 = vpop.permute.xlu0 %1486
    %v1490 = vunpack.c.l.s4 839922192
    %v1491 = vunpack.c.0.s8 %v1490
    %v1492 = vperm.slane %v1487, %v1491
    %1494 = vset.pattern.permute.xlu0 0
    %1495 = vperm.xlu0 %1494, %v1221
    %v1496 = vpop.permute.xlu0 %1495
    %v1499 = vunpack.c.l.s4 839922192
    %v1500 = vunpack.c.0.s8 %v1499
    %v1501 = vperm.slane %v1496, %v1500
    %1503 = vset.pattern.permute.xlu0 0
    %1504 = vperm.xlu0 %1503, %v1222
    %v1505 = vpop.permute.xlu0 %1504
    %v1508 = vunpack.c.l.s4 839922192
    %v1509 = vunpack.c.0.s8 %v1508
    %v1510 = vperm.slane %v1505, %v1509
    %v1511 = vunpack.c.l.bf16 %v1159
    %v1512 = vunpack.c.l.bf16 %v1160
    %v1513 = vunpack.c.l.bf16 %v1161
    %v1514 = vunpack.c.l.bf16 %v1162
    %v1515 = vunpack.c.l.bf16 %v1163
    %v1516 = vunpack.c.l.bf16 %v1164
    %v1517 = vunpack.c.l.bf16 %v1165
    %v1518 = vunpack.c.l.bf16 %v1166
    %v1519 = vunpack.c.l.bf16 %v1167
    %v1520 = vunpack.c.l.bf16 %v1168
    %v1521 = vunpack.c.l.bf16 %v1169
    %v1522 = vunpack.c.l.bf16 %v1170
    %v1523 = vunpack.c.l.bf16 %v1171
    %v1524 = vunpack.c.l.bf16 %v1172
    %v1525 = vunpack.c.l.bf16 %v1173
    %v1526 = vunpack.c.l.bf16 %v1174
    %v1527 = vunpack.c.l.bf16 %v1175
    %v1528 = vunpack.c.l.bf16 %v1176
    %v1529 = vunpack.c.l.bf16 %v1177
    %v1530 = vunpack.c.l.bf16 %v1178
    %v1531 = vunpack.c.l.bf16 %v1179
    %v1532 = vunpack.c.l.bf16 %v1180
    %v1533 = vunpack.c.l.bf16 %v1181
    %v1534 = vunpack.c.l.bf16 %v1182
    %v1535 = vunpack.c.l.bf16 %v1183
    %v1536 = vunpack.c.l.bf16 %v1184
    %v1537 = vunpack.c.l.bf16 %v1185
    %v1538 = vunpack.c.l.bf16 %v1186
    %v1539 = vunpack.c.l.bf16 %v1187
    %v1540 = vunpack.c.l.bf16 %v1188
    %v1541 = vunpack.c.l.bf16 %v1189
    %v1542 = vunpack.c.l.bf16 %v1190
    %v1543 = vunpack.c.l.bf16 %v1231
    %v1544 = vunpack.c.l.bf16 %v1240
    %v1545 = vunpack.c.l.bf16 %v1249
    %v1546 = vunpack.c.l.bf16 %v1258
    %v1547 = vunpack.c.l.bf16 %v1267
    %v1548 = vunpack.c.l.bf16 %v1276
    %v1549 = vunpack.c.l.bf16 %v1285
    %v1550 = vunpack.c.l.bf16 %v1294
    %v1551 = vunpack.c.l.bf16 %v1303
    %v1552 = vunpack.c.l.bf16 %v1312
    %v1553 = vunpack.c.l.bf16 %v1321
    %v1554 = vunpack.c.l.bf16 %v1330
    %v1555 = vunpack.c.l.bf16 %v1339
    %v1556 = vunpack.c.l.bf16 %v1348
    %v1557 = vunpack.c.l.bf16 %v1357
    %v1558 = vunpack.c.l.bf16 %v1366
    %v1559 = vunpack.c.l.bf16 %v1375
    %v1560 = vunpack.c.l.bf16 %v1384
    %v1561 = vunpack.c.l.bf16 %v1393
    %v1562 = vunpack.c.l.bf16 %v1402
    %v1563 = vunpack.c.l.bf16 %v1411
    %v1564 = vunpack.c.l.bf16 %v1420
    %v1565 = vunpack.c.l.bf16 %v1429
    %v1566 = vunpack.c.l.bf16 %v1438
    %v1567 = vunpack.c.l.bf16 %v1447
    %v1568 = vunpack.c.l.bf16 %v1456
    %v1569 = vunpack.c.l.bf16 %v1465
    %v1570 = vunpack.c.l.bf16 %v1474
    %v1571 = vunpack.c.l.bf16 %v1483
    %v1572 = vunpack.c.l.bf16 %v1492
    %v1573 = vunpack.c.l.bf16 %v1501
    %v1574 = vunpack.c.l.bf16 %v1510
    %v1575 = vadd.f32 %v1511, %v1543
    %v1576 = vadd.f32 %v1512, %v1544
    %v1577 = vadd.f32 %v1513, %v1545
    %v1578 = vadd.f32 %v1514, %v1546
    %v1579 = vadd.f32 %v1515, %v1547
    %v1580 = vadd.f32 %v1516, %v1548
    %v1581 = vadd.f32 %v1517, %v1549
    %v1582 = vadd.f32 %v1518, %v1550
    %v1583 = vadd.f32 %v1519, %v1551
    %v1584 = vadd.f32 %v1520, %v1552
    %v1585 = vadd.f32 %v1521, %v1553
    %v1586 = vadd.f32 %v1522, %v1554
    %v1587 = vadd.f32 %v1523, %v1555
    %v1588 = vadd.f32 %v1524, %v1556
    %v1589 = vadd.f32 %v1525, %v1557
    %v1590 = vadd.f32 %v1526, %v1558
    %v1591 = vadd.f32 %v1527, %v1559
    %v1592 = vadd.f32 %v1528, %v1560
    %v1593 = vadd.f32 %v1529, %v1561
    %v1594 = vadd.f32 %v1530, %v1562
    %v1595 = vadd.f32 %v1531, %v1563
    %v1596 = vadd.f32 %v1532, %v1564
    %v1597 = vadd.f32 %v1533, %v1565
    %v1598 = vadd.f32 %v1534, %v1566
    %v1599 = vadd.f32 %v1535, %v1567
    %v1600 = vadd.f32 %v1536, %v1568
    %v1601 = vadd.f32 %v1537, %v1569
    %v1602 = vadd.f32 %v1538, %v1570
    %v1603 = vadd.f32 %v1539, %v1571
    %v1604 = vadd.f32 %v1540, %v1572
    %v1605 = vadd.f32 %v1541, %v1573
    %v1606 = vadd.f32 %v1542, %v1574
    %v1607 = vpack.c.bf16 %v1575, %v1575
    %v1608 = vpack.c.bf16 %v1576, %v1576
    %v1609 = vpack.c.bf16 %v1577, %v1577
    %v1610 = vpack.c.bf16 %v1578, %v1578
    %v1611 = vpack.c.bf16 %v1579, %v1579
    %v1612 = vpack.c.bf16 %v1580, %v1580
    %v1613 = vpack.c.bf16 %v1581, %v1581
    %v1614 = vpack.c.bf16 %v1582, %v1582
    %v1615 = vpack.c.bf16 %v1583, %v1583
    %v1616 = vpack.c.bf16 %v1584, %v1584
    %v1617 = vpack.c.bf16 %v1585, %v1585
    %v1618 = vpack.c.bf16 %v1586, %v1586
    %v1619 = vpack.c.bf16 %v1587, %v1587
    %v1620 = vpack.c.bf16 %v1588, %v1588
    %v1621 = vpack.c.bf16 %v1589, %v1589
    %v1622 = vpack.c.bf16 %v1590, %v1590
    %v1623 = vpack.c.bf16 %v1591, %v1591
    %v1624 = vpack.c.bf16 %v1592, %v1592
    %v1625 = vpack.c.bf16 %v1593, %v1593
    %v1626 = vpack.c.bf16 %v1594, %v1594
    %v1627 = vpack.c.bf16 %v1595, %v1595
    %v1628 = vpack.c.bf16 %v1596, %v1596
    %v1629 = vpack.c.bf16 %v1597, %v1597
    %v1630 = vpack.c.bf16 %v1598, %v1598
    %v1631 = vpack.c.bf16 %v1599, %v1599
    %v1632 = vpack.c.bf16 %v1600, %v1600
    %v1633 = vpack.c.bf16 %v1601, %v1601
    %v1634 = vpack.c.bf16 %v1602, %v1602
    %v1635 = vpack.c.bf16 %v1603, %v1603
    %v1636 = vpack.c.bf16 %v1604, %v1604
    %v1637 = vpack.c.bf16 %v1605, %v1605
    %v1638 = vpack.c.bf16 %v1606, %v1606
    %v1639 = vunpack.c.l.bf16 %v1607
    %v1640 = vunpack.c.l.bf16 %v1608
    %v1641 = vunpack.c.l.bf16 %v1609
    %v1642 = vunpack.c.l.bf16 %v1610
    %v1643 = vunpack.c.l.bf16 %v1611
    %v1644 = vunpack.c.l.bf16 %v1612
    %v1645 = vunpack.c.l.bf16 %v1613
    %v1646 = vunpack.c.l.bf16 %v1614
    %v1647 = vunpack.c.l.bf16 %v1615
    %v1648 = vunpack.c.l.bf16 %v1616
    %v1649 = vunpack.c.l.bf16 %v1617
    %v1650 = vunpack.c.l.bf16 %v1618
    %v1651 = vunpack.c.l.bf16 %v1619
    %v1652 = vunpack.c.l.bf16 %v1620
    %v1653 = vunpack.c.l.bf16 %v1621
    %v1654 = vunpack.c.l.bf16 %v1622
    %v1655 = vunpack.c.l.bf16 %v1623
    %v1656 = vunpack.c.l.bf16 %v1624
    %v1657 = vunpack.c.l.bf16 %v1625
    %v1658 = vunpack.c.l.bf16 %v1626
    %v1659 = vunpack.c.l.bf16 %v1627
    %v1660 = vunpack.c.l.bf16 %v1628
    %v1661 = vunpack.c.l.bf16 %v1629
    %v1662 = vunpack.c.l.bf16 %v1630
    %v1663 = vunpack.c.l.bf16 %v1631
    %v1664 = vunpack.c.l.bf16 %v1632
    %v1665 = vunpack.c.l.bf16 %v1633
    %v1666 = vunpack.c.l.bf16 %v1634
    %v1667 = vunpack.c.l.bf16 %v1635
    %v1668 = vunpack.c.l.bf16 %v1636
    %v1669 = vunpack.c.l.bf16 %v1637
    %v1670 = vunpack.c.l.bf16 %v1638
    %vm1671 = vcmp.gt.f32.partialorder %v1639, 0.0
    %vm1672 = vcmp.gt.f32.partialorder %v1640, 0.0
    %vm1673 = vcmp.gt.f32.partialorder %v1641, 0.0
    %vm1674 = vcmp.gt.f32.partialorder %v1642, 0.0
    %vm1675 = vcmp.gt.f32.partialorder %v1643, 0.0
    %vm1676 = vcmp.gt.f32.partialorder %v1644, 0.0
    %vm1677 = vcmp.gt.f32.partialorder %v1645, 0.0
    %vm1678 = vcmp.gt.f32.partialorder %v1646, 0.0
    %vm1679 = vcmp.gt.f32.partialorder %v1647, 0.0
    %vm1680 = vcmp.gt.f32.partialorder %v1648, 0.0
    %vm1681 = vcmp.gt.f32.partialorder %v1649, 0.0
    %vm1682 = vcmp.gt.f32.partialorder %v1650, 0.0
    %vm1683 = vcmp.gt.f32.partialorder %v1651, 0.0
    %vm1684 = vcmp.gt.f32.partialorder %v1652, 0.0
    %vm1685 = vcmp.gt.f32.partialorder %v1653, 0.0
    %vm1686 = vcmp.gt.f32.partialorder %v1654, 0.0
    %vm1687 = vcmp.gt.f32.partialorder %v1655, 0.0
    %vm1688 = vcmp.gt.f32.partialorder %v1656, 0.0
    %vm1689 = vcmp.gt.f32.partialorder %v1657, 0.0
    %vm1690 = vcmp.gt.f32.partialorder %v1658, 0.0
    %vm1691 = vcmp.gt.f32.partialorder %v1659, 0.0
    %vm1692 = vcmp.gt.f32.partialorder %v1660, 0.0
    %vm1693 = vcmp.gt.f32.partialorder %v1661, 0.0
    %vm1694 = vcmp.gt.f32.partialorder %v1662, 0.0
    %vm1695 = vcmp.gt.f32.partialorder %v1663, 0.0
    %vm1696 = vcmp.gt.f32.partialorder %v1664, 0.0
    %vm1697 = vcmp.gt.f32.partialorder %v1665, 0.0
    %vm1698 = vcmp.gt.f32.partialorder %v1666, 0.0
    %vm1699 = vcmp.gt.f32.partialorder %v1667, 0.0
    %vm1700 = vcmp.gt.f32.partialorder %v1668, 0.0
    %vm1701 = vcmp.gt.f32.partialorder %v1669, 0.0
    %vm1702 = vcmp.gt.f32.partialorder %v1670, 0.0
    %v1703 = vmul.f32 %v1639, 0.20019531
    %v1704 = vmul.f32 %v1640, 0.20019531
    %v1705 = vmul.f32 %v1641, 0.20019531
    %v1706 = vmul.f32 %v1642, 0.20019531
    %v1707 = vmul.f32 %v1643, 0.20019531
    %v1708 = vmul.f32 %v1644, 0.20019531
    %v1709 = vmul.f32 %v1645, 0.20019531
    %v1710 = vmul.f32 %v1646, 0.20019531
    %v1711 = vmul.f32 %v1647, 0.20019531
    %v1712 = vmul.f32 %v1648, 0.20019531
    %v1713 = vmul.f32 %v1649, 0.20019531
    %v1714 = vmul.f32 %v1650, 0.20019531
    %v1715 = vmul.f32 %v1651, 0.20019531
    %v1716 = vmul.f32 %v1652, 0.20019531
    %v1717 = vmul.f32 %v1653, 0.20019531
    %v1718 = vmul.f32 %v1654, 0.20019531
    %v1719 = vmul.f32 %v1655, 0.20019531
    %v1720 = vmul.f32 %v1656, 0.20019531
    %v1721 = vmul.f32 %v1657, 0.20019531
    %v1722 = vmul.f32 %v1658, 0.20019531
    %v1723 = vmul.f32 %v1659, 0.20019531
    %v1724 = vmul.f32 %v1660, 0.20019531
    %v1725 = vmul.f32 %v1661, 0.20019531
    %v1726 = vmul.f32 %v1662, 0.20019531
    %v1727 = vmul.f32 %v1663, 0.20019531
    %v1728 = vmul.f32 %v1664, 0.20019531
    %v1729 = vmul.f32 %v1665, 0.20019531
    %v1730 = vmul.f32 %v1666, 0.20019531
    %v1731 = vmul.f32 %v1667, 0.20019531
    %v1732 = vmul.f32 %v1668, 0.20019531
    %v1733 = vmul.f32 %v1669, 0.20019531
    %v1734 = vmul.f32 %v1670, 0.20019531
    %v1735 = vpack.c.bf16 %v1703, %v1703
    %v1736 = vpack.c.bf16 %v1704, %v1704
    %v1737 = vpack.c.bf16 %v1705, %v1705
    %v1738 = vpack.c.bf16 %v1706, %v1706
    %v1739 = vpack.c.bf16 %v1707, %v1707
    %v1740 = vpack.c.bf16 %v1708, %v1708
    %v1741 = vpack.c.bf16 %v1709, %v1709
    %v1742 = vpack.c.bf16 %v1710, %v1710
    %v1743 = vpack.c.bf16 %v1711, %v1711
    %v1744 = vpack.c.bf16 %v1712, %v1712
    %v1745 = vpack.c.bf16 %v1713, %v1713
    %v1746 = vpack.c.bf16 %v1714, %v1714
    %v1747 = vpack.c.bf16 %v1715, %v1715
    %v1748 = vpack.c.bf16 %v1716, %v1716
    %v1749 = vpack.c.bf16 %v1717, %v1717
    %v1750 = vpack.c.bf16 %v1718, %v1718
    %v1751 = vpack.c.bf16 %v1719, %v1719
    %v1752 = vpack.c.bf16 %v1720, %v1720
    %v1753 = vpack.c.bf16 %v1721, %v1721
    %v1754 = vpack.c.bf16 %v1722, %v1722
    %v1755 = vpack.c.bf16 %v1723, %v1723
    %v1756 = vpack.c.bf16 %v1724, %v1724
    %v1757 = vpack.c.bf16 %v1725, %v1725
    %v1758 = vpack.c.bf16 %v1726, %v1726
    %v1759 = vpack.c.bf16 %v1727, %v1727
    %v1760 = vpack.c.bf16 %v1728, %v1728
    %v1761 = vpack.c.bf16 %v1729, %v1729
    %v1762 = vpack.c.bf16 %v1730, %v1730
    %v1763 = vpack.c.bf16 %v1731, %v1731
    %v1764 = vpack.c.bf16 %v1732, %v1732
    %v1765 = vpack.c.bf16 %v1733, %v1733
    %v1766 = vpack.c.bf16 %v1734, %v1734
    %vm1767 = vmpackc.low %vm1671, %vm1671
    %vm1768 = vmpackc.low %vm1672, %vm1672
    %vm1769 = vmpackc.low %vm1673, %vm1673
    %vm1770 = vmpackc.low %vm1674, %vm1674
    %vm1771 = vmpackc.low %vm1675, %vm1675
    %vm1772 = vmpackc.low %vm1676, %vm1676
    %vm1773 = vmpackc.low %vm1677, %vm1677
    %vm1774 = vmpackc.low %vm1678, %vm1678
    %vm1775 = vmpackc.low %vm1679, %vm1679
    %vm1776 = vmpackc.low %vm1680, %vm1680
    %vm1777 = vmpackc.low %vm1681, %vm1681
    %vm1778 = vmpackc.low %vm1682, %vm1682
    %vm1779 = vmpackc.low %vm1683, %vm1683
    %vm1780 = vmpackc.low %vm1684, %vm1684
    %vm1781 = vmpackc.low %vm1685, %vm1685
    %vm1782 = vmpackc.low %vm1686, %vm1686
    %vm1783 = vmpackc.low %vm1687, %vm1687
    %vm1784 = vmpackc.low %vm1688, %vm1688
    %vm1785 = vmpackc.low %vm1689, %vm1689
    %vm1786 = vmpackc.low %vm1690, %vm1690
    %vm1787 = vmpackc.low %vm1691, %vm1691
    %vm1788 = vmpackc.low %vm1692, %vm1692
    %vm1789 = vmpackc.low %vm1693, %vm1693
    %vm1790 = vmpackc.low %vm1694, %vm1694
    %vm1791 = vmpackc.low %vm1695, %vm1695
    %vm1792 = vmpackc.low %vm1696, %vm1696
    %vm1793 = vmpackc.low %vm1697, %vm1697
    %vm1794 = vmpackc.low %vm1698, %vm1698
    %vm1795 = vmpackc.low %vm1699, %vm1699
    %vm1796 = vmpackc.low %vm1700, %vm1700
    %vm1797 = vmpackc.low %vm1701, %vm1701
    %vm1798 = vmpackc.low %vm1702, %vm1702
    %v1799 = vsel %vm1767, %v1607, %v1735
    %v1800 = vsel %vm1768, %v1608, %v1736
    %v1801 = vsel %vm1769, %v1609, %v1737
    %v1802 = vsel %vm1770, %v1610, %v1738
    %v1803 = vsel %vm1771, %v1611, %v1739
    %v1804 = vsel %vm1772, %v1612, %v1740
    %v1805 = vsel %vm1773, %v1613, %v1741
    %v1806 = vsel %vm1774, %v1614, %v1742
    %v1807 = vsel %vm1775, %v1615, %v1743
    %v1808 = vsel %vm1776, %v1616, %v1744
    %v1809 = vsel %vm1777, %v1617, %v1745
    %v1810 = vsel %vm1778, %v1618, %v1746
    %v1811 = vsel %vm1779, %v1619, %v1747
    %v1812 = vsel %vm1780, %v1620, %v1748
    %v1813 = vsel %vm1781, %v1621, %v1749
    %v1814 = vsel %vm1782, %v1622, %v1750
    %v1815 = vsel %vm1783, %v1623, %v1751
    %v1816 = vsel %vm1784, %v1624, %v1752
    %v1817 = vsel %vm1785, %v1625, %v1753
    %v1818 = vsel %vm1786, %v1626, %v1754
    %v1819 = vsel %vm1787, %v1627, %v1755
    %v1820 = vsel %vm1788, %v1628, %v1756
    %v1821 = vsel %vm1789, %v1629, %v1757
    %v1822 = vsel %vm1790, %v1630, %v1758
    %v1823 = vsel %vm1791, %v1631, %v1759
    %v1824 = vsel %vm1792, %v1632, %v1760
    %v1825 = vsel %vm1793, %v1633, %v1761
    %v1826 = vsel %vm1794, %v1634, %v1762
    %v1827 = vsel %vm1795, %v1635, %v1763
    %v1828 = vsel %vm1796, %v1636, %v1764
    %v1829 = vsel %vm1797, %v1637, %v1765
    %v1830 = vsel %vm1798, %v1638, %v1766
    %v1831 = vld [vmem:[%s5] sm:$0xff]
    %v1832 = vld [vmem:[%s5 + $0x8] sm:$0xff]
    %v1833 = vld [vmem:[%s5 + $0x10] sm:$0xff]
    %v1834 = vld [vmem:[%s5 + $0x18] sm:$0xff]
    %v1835 = vld [vmem:[%s5 + $0x20] sm:$0xff]
    %v1836 = vld [vmem:[%s5 + $0x28] sm:$0xff]
    %v1837 = vld [vmem:[%s5 + $0x30] sm:$0xff]
    %v1838 = vld [vmem:[%s5 + $0x38] sm:$0xff]
    %v1839 = vld [vmem:[%s5 + $0x40] sm:$0xff]
    %v1840 = vld [vmem:[%s5 + $0x48] sm:$0xff]
    %v1841 = vld [vmem:[%s5 + $0x50] sm:$0xff]
    %v1842 = vld [vmem:[%s5 + $0x58] sm:$0xff]
    %v1843 = vld [vmem:[%s5 + $0x60] sm:$0xff]
    %v1844 = vld [vmem:[%s5 + $0x68] sm:$0xff]
    %v1845 = vld [vmem:[%s5 + $0x70] sm:$0xff]
    %v1846 = vld [vmem:[%s5 + $0x78] sm:$0xff]
    %v1847 = vld [vmem:[%s5 + $0x80] sm:$0xff]
    %v1848 = vld [vmem:[%s5 + $0x88] sm:$0xff]
    %v1849 = vld [vmem:[%s5 + $0x90] sm:$0xff]
    %v1850 = vld [vmem:[%s5 + $0x98] sm:$0xff]
    %v1851 = vld [vmem:[%s5 + $0xa0] sm:$0xff]
    %v1852 = vld [vmem:[%s5 + $0xa8] sm:$0xff]
    %v1853 = vld [vmem:[%s5 + $0xb0] sm:$0xff]
    %v1854 = vld [vmem:[%s5 + $0xb8] sm:$0xff]
    %v1855 = vld [vmem:[%s5 + $0xc0] sm:$0xff]
    %v1856 = vld [vmem:[%s5 + $0xc8] sm:$0xff]
    %v1857 = vld [vmem:[%s5 + $0xd0] sm:$0xff]
    %v1858 = vld [vmem:[%s5 + $0xd8] sm:$0xff]
    %v1859 = vld [vmem:[%s5 + $0xe0] sm:$0xff]
    %v1860 = vld [vmem:[%s5 + $0xe8] sm:$0xff]
    %v1861 = vld [vmem:[%s5 + $0xf0] sm:$0xff]
    %v1862 = vld [vmem:[%s5 + $0xf8] sm:$0xff]
    %v1895 = vunpack.c.l.b16 %v1831
    %v1896 = vunpack.c.h.b16 %v1831
    %v1897 = vunpack.c.l.b16 %v1832
    %v1898 = vunpack.c.h.b16 %v1832
    %v1899 = vunpack.c.l.b16 %v1833
    %v1900 = vunpack.c.h.b16 %v1833
    %v1901 = vunpack.c.l.b16 %v1834
    %v1902 = vunpack.c.h.b16 %v1834
    %v1903 = vunpack.c.l.b16 %v1835
    %v1904 = vunpack.c.h.b16 %v1835
    %v1905 = vunpack.c.l.b16 %v1836
    %v1906 = vunpack.c.h.b16 %v1836
    %v1907 = vunpack.c.l.b16 %v1837
    %v1908 = vunpack.c.h.b16 %v1837
    %v1909 = vunpack.c.l.b16 %v1838
    %v1910 = vunpack.c.h.b16 %v1838
    %v1911 = vunpack.c.l.b16 %v1839
    %v1912 = vunpack.c.h.b16 %v1839
    %v1913 = vunpack.c.l.b16 %v1840
    %v1914 = vunpack.c.h.b16 %v1840
    %v1915 = vunpack.c.l.b16 %v1841
    %v1916 = vunpack.c.h.b16 %v1841
    %v1917 = vunpack.c.l.b16 %v1842
    %v1918 = vunpack.c.h.b16 %v1842
    %v1919 = vunpack.c.l.b16 %v1843
    %v1920 = vunpack.c.h.b16 %v1843
    %v1921 = vunpack.c.l.b16 %v1844
    %v1922 = vunpack.c.h.b16 %v1844
    %v1923 = vunpack.c.l.b16 %v1845
    %v1924 = vunpack.c.h.b16 %v1845
    %v1925 = vunpack.c.l.b16 %v1846
    %v1926 = vunpack.c.h.b16 %v1846
    %v1927 = vunpack.c.l.b16 %v1847
    %v1928 = vunpack.c.h.b16 %v1847
    %v1929 = vunpack.c.l.b16 %v1848
    %v1930 = vunpack.c.h.b16 %v1848
    %v1931 = vunpack.c.l.b16 %v1849
    %v1932 = vunpack.c.h.b16 %v1849
    %v1933 = vunpack.c.l.b16 %v1850
    %v1934 = vunpack.c.h.b16 %v1850
    %v1935 = vunpack.c.l.b16 %v1851
    %v1936 = vunpack.c.h.b16 %v1851
    %v1937 = vunpack.c.l.b16 %v1852
    %v1938 = vunpack.c.h.b16 %v1852
    %v1939 = vunpack.c.l.b16 %v1853
    %v1940 = vunpack.c.h.b16 %v1853
    %v1941 = vunpack.c.l.b16 %v1854
    %v1942 = vunpack.c.h.b16 %v1854
    %v1943 = vunpack.c.l.b16 %v1855
    %v1944 = vunpack.c.h.b16 %v1855
    %v1945 = vunpack.c.l.b16 %v1856
    %v1946 = vunpack.c.h.b16 %v1856
    %v1947 = vunpack.c.l.b16 %v1857
    %v1948 = vunpack.c.h.b16 %v1857
    %v1949 = vunpack.c.l.b16 %v1858
    %v1950 = vunpack.c.h.b16 %v1858
    %v1951 = vunpack.c.l.b16 %v1859
    %v1952 = vunpack.c.h.b16 %v1859
    %v1953 = vunpack.c.l.b16 %v1860
    %v1954 = vunpack.c.h.b16 %v1860
    %v1955 = vunpack.c.l.b16 %v1861
    %v1956 = vunpack.c.h.b16 %v1861
    %v1957 = vunpack.c.l.b16 %v1862
    %v1958 = vunpack.c.h.b16 %v1862
    %v1959 = vpack.c.b16 %v1897, %v1895
    %v1960 = vpack.c.b16 %v1898, %v1896
    %v1961 = vpack.c.b16 %v1901, %v1899
    %v1962 = vpack.c.b16 %v1902, %v1900
    %v1963 = vpack.c.b16 %v1905, %v1903
    %v1964 = vpack.c.b16 %v1906, %v1904
    %v1965 = vpack.c.b16 %v1909, %v1907
    %v1966 = vpack.c.b16 %v1910, %v1908
    %v1967 = vpack.c.b16 %v1913, %v1911
    %v1968 = vpack.c.b16 %v1914, %v1912
    %v1969 = vpack.c.b16 %v1917, %v1915
    %v1970 = vpack.c.b16 %v1918, %v1916
    %v1971 = vpack.c.b16 %v1921, %v1919
    %v1972 = vpack.c.b16 %v1922, %v1920
    %v1973 = vpack.c.b16 %v1925, %v1923
    %v1974 = vpack.c.b16 %v1926, %v1924
    %v1975 = vpack.c.b16 %v1929, %v1927
    %v1976 = vpack.c.b16 %v1930, %v1928
    %v1977 = vpack.c.b16 %v1933, %v1931
    %v1978 = vpack.c.b16 %v1934, %v1932
    %v1979 = vpack.c.b16 %v1937, %v1935
    %v1980 = vpack.c.b16 %v1938, %v1936
    %v1981 = vpack.c.b16 %v1941, %v1939
    %v1982 = vpack.c.b16 %v1942, %v1940
    %v1983 = vpack.c.b16 %v1945, %v1943
    %v1984 = vpack.c.b16 %v1946, %v1944
    %v1985 = vpack.c.b16 %v1949, %v1947
    %v1986 = vpack.c.b16 %v1950, %v1948
    %v1987 = vpack.c.b16 %v1953, %v1951
    %v1988 = vpack.c.b16 %v1954, %v1952
    %v1989 = vpack.c.b16 %v1957, %v1955
    %v1990 = vpack.c.b16 %v1958, %v1956
    %v2055 = vunpack.c.l.b16 %v1799
    %v2056 = vunpack.c.l.b16 %v1800
    %v2057 = vunpack.c.l.b16 %v1801
    %v2058 = vunpack.c.l.b16 %v1802
    %v2059 = vunpack.c.l.b16 %v1803
    %v2060 = vunpack.c.l.b16 %v1804
    %v2061 = vunpack.c.l.b16 %v1805
    %v2062 = vunpack.c.l.b16 %v1806
    %v2063 = vunpack.c.l.b16 %v1807
    %v2064 = vunpack.c.l.b16 %v1808
    %v2065 = vunpack.c.l.b16 %v1809
    %v2066 = vunpack.c.l.b16 %v1810
    %v2067 = vunpack.c.l.b16 %v1811
    %v2068 = vunpack.c.l.b16 %v1812
    %v2069 = vunpack.c.l.b16 %v1813
    %v2070 = vunpack.c.l.b16 %v1814
    %v2071 = vunpack.c.l.b16 %v1815
    %v2072 = vunpack.c.l.b16 %v1816
    %v2073 = vunpack.c.l.b16 %v1817
    %v2074 = vunpack.c.l.b16 %v1818
    %v2075 = vunpack.c.l.b16 %v1819
    %v2076 = vunpack.c.l.b16 %v1820
    %v2077 = vunpack.c.l.b16 %v1821
    %v2078 = vunpack.c.l.b16 %v1822
    %v2079 = vunpack.c.l.b16 %v1823
    %v2080 = vunpack.c.l.b16 %v1824
    %v2081 = vunpack.c.l.b16 %v1825
    %v2082 = vunpack.c.l.b16 %v1826
    %v2083 = vunpack.c.l.b16 %v1827
    %v2084 = vunpack.c.l.b16 %v1828
    %v2085 = vunpack.c.l.b16 %v1829
    %v2086 = vunpack.c.l.b16 %v1830
    %v2087 = vpack.c.b16 %v2056, %v2055
    %v2088 = vpack.c.b16 %v2058, %v2057
    %v2089 = vpack.c.b16 %v2060, %v2059
    %v2090 = vpack.c.b16 %v2062, %v2061
    %v2091 = vpack.c.b16 %v2064, %v2063
    %v2092 = vpack.c.b16 %v2066, %v2065
    %v2093 = vpack.c.b16 %v2068, %v2067
    %v2094 = vpack.c.b16 %v2070, %v2069
    %v2095 = vpack.c.b16 %v2072, %v2071
    %v2096 = vpack.c.b16 %v2074, %v2073
    %v2097 = vpack.c.b16 %v2076, %v2075
    %v2098 = vpack.c.b16 %v2078, %v2077
    %v2099 = vpack.c.b16 %v2080, %v2079
    %v2100 = vpack.c.b16 %v2082, %v2081
    %v2101 = vpack.c.b16 %v2084, %v2083
    %v2102 = vpack.c.b16 %v2086, %v2085
    %2119 = vmatpush.bf16.msra.mxu0 %v2094
    %2120 = vmatpush.bf16.msra.mxu0 %v2093
    %2121 = vmatpush.bf16.msra.mxu0 %v2092
    %2122 = vmatpush.bf16.msra.mxu0 %v2091
    %2123 = vmatpush.bf16.msra.mxu0 %v2090
    %2124 = vmatpush.bf16.msra.mxu0 %v2089
    %2125 = vmatpush.bf16.msra.mxu0 %v2088
    %2126 = vmatpush.bf16.msra.mxu0 %v2087
    %2127 = vmatmul.bf16.gmra.mxu0 %v1959
    %v2128 = vpop.f32.mrf.mxu0
    %v2129 = vadd.f32 0.0, %v2128
    %v2130 = vpop.f32.mrf.mxu0
    %v2131 = vadd.f32 0.0, %v2130
    %2132 = vmatmul.bf16.gmra.mxu0 %v1961
    %v2133 = vpop.f32.mrf.mxu0
    %v2134 = vadd.f32 0.0, %v2133
    %v2135 = vpop.f32.mrf.mxu0
    %v2136 = vadd.f32 0.0, %v2135
    %2137 = vmatmul.bf16.gmra.mxu0 %v1963
    %v2138 = vpop.f32.mrf.mxu0
    %v2139 = vadd.f32 0.0, %v2138
    %v2140 = vpop.f32.mrf.mxu0
    %v2141 = vadd.f32 0.0, %v2140
    %2142 = vmatmul.bf16.gmra.mxu0 %v1965
    %v2143 = vpop.f32.mrf.mxu0
    %v2144 = vadd.f32 0.0, %v2143
    %v2145 = vpop.f32.mrf.mxu0
    %v2146 = vadd.f32 0.0, %v2145
    %2147 = vmatmul.bf16.gmra.mxu0 %v1967
    %v2148 = vpop.f32.mrf.mxu0
    %v2149 = vadd.f32 0.0, %v2148
    %v2150 = vpop.f32.mrf.mxu0
    %v2151 = vadd.f32 0.0, %v2150
    %2152 = vmatmul.bf16.gmra.mxu0 %v1969
    %v2153 = vpop.f32.mrf.mxu0
    %v2154 = vadd.f32 0.0, %v2153
    %v2155 = vpop.f32.mrf.mxu0
    %v2156 = vadd.f32 0.0, %v2155
    %2157 = vmatmul.bf16.gmra.mxu0 %v1971
    %v2158 = vpop.f32.mrf.mxu0
    %v2159 = vadd.f32 0.0, %v2158
    %v2160 = vpop.f32.mrf.mxu0
    %v2161 = vadd.f32 0.0, %v2160
    %2162 = vmatmul.bf16.gmra.mxu0 %v1973
    %v2163 = vpop.f32.mrf.mxu0
    %v2164 = vadd.f32 0.0, %v2163
    %v2165 = vpop.f32.mrf.mxu0
    %v2166 = vadd.f32 0.0, %v2165
    %2167 = vmatmul.bf16.gmra.mxu0 %v1975
    %v2168 = vpop.f32.mrf.mxu0
    %v2169 = vadd.f32 0.0, %v2168
    %v2170 = vpop.f32.mrf.mxu0
    %v2171 = vadd.f32 0.0, %v2170
    %2172 = vmatmul.bf16.gmra.mxu0 %v1977
    %v2173 = vpop.f32.mrf.mxu0
    %v2174 = vadd.f32 0.0, %v2173
    %v2175 = vpop.f32.mrf.mxu0
    %v2176 = vadd.f32 0.0, %v2175
    %2177 = vmatmul.bf16.gmra.mxu0 %v1979
    %v2178 = vpop.f32.mrf.mxu0
    %v2179 = vadd.f32 0.0, %v2178
    %v2180 = vpop.f32.mrf.mxu0
    %v2181 = vadd.f32 0.0, %v2180
    %2182 = vmatmul.bf16.gmra.mxu0 %v1981
    %v2183 = vpop.f32.mrf.mxu0
    %v2184 = vadd.f32 0.0, %v2183
    %v2185 = vpop.f32.mrf.mxu0
    %v2186 = vadd.f32 0.0, %v2185
    %2187 = vmatmul.bf16.gmra.mxu0 %v1983
    %v2188 = vpop.f32.mrf.mxu0
    %v2189 = vadd.f32 0.0, %v2188
    %v2190 = vpop.f32.mrf.mxu0
    %v2191 = vadd.f32 0.0, %v2190
    %2192 = vmatmul.bf16.gmra.mxu0 %v1985
    %v2193 = vpop.f32.mrf.mxu0
    %v2194 = vadd.f32 0.0, %v2193
    %v2195 = vpop.f32.mrf.mxu0
    %v2196 = vadd.f32 0.0, %v2195
    %2197 = vmatmul.bf16.gmra.mxu0 %v1987
    %v2198 = vpop.f32.mrf.mxu0
    %v2199 = vadd.f32 0.0, %v2198
    %v2200 = vpop.f32.mrf.mxu0
    %v2201 = vadd.f32 0.0, %v2200
    %2202 = vmatmul.bf16.gmra.mxu0 %v1989
    %v2203 = vpop.f32.mrf.mxu0
    %v2204 = vadd.f32 0.0, %v2203
    %v2205 = vpop.f32.mrf.mxu0
    %v2206 = vadd.f32 0.0, %v2205
    %2207 = vdwg.mxu0
    %2208 = vmatpush.bf16.msra.mxu0 %v2102
    %2209 = vmatpush.bf16.msra.mxu0 %v2101
    %2210 = vmatpush.bf16.msra.mxu0 %v2100
    %2211 = vmatpush.bf16.msra.mxu0 %v2099
    %2212 = vmatpush.bf16.msra.mxu0 %v2098
    %2213 = vmatpush.bf16.msra.mxu0 %v2097
    %2214 = vmatpush.bf16.msra.mxu0 %v2096
    %2215 = vmatpush.bf16.msra.mxu0 %v2095
    %2216 = vmatmul.bf16.gmra.mxu0 %v1960
    %v2217 = vpop.f32.mrf.mxu0
    %v2218 = vadd.f32 %v2129, %v2217
    %v2219 = vpop.f32.mrf.mxu0
    %v2220 = vadd.f32 %v2131, %v2219
    %2221 = vmatmul.bf16.gmra.mxu0 %v1962
    %v2222 = vpop.f32.mrf.mxu0
    %v2223 = vadd.f32 %v2134, %v2222
    %v2224 = vpop.f32.mrf.mxu0
    %v2225 = vadd.f32 %v2136, %v2224
    %2226 = vmatmul.bf16.gmra.mxu0 %v1964
    %v2227 = vpop.f32.mrf.mxu0
    %v2228 = vadd.f32 %v2139, %v2227
    %v2229 = vpop.f32.mrf.mxu0
    %v2230 = vadd.f32 %v2141, %v2229
    %2231 = vmatmul.bf16.gmra.mxu0 %v1966
    %v2232 = vpop.f32.mrf.mxu0
    %v2233 = vadd.f32 %v2144, %v2232
    %v2234 = vpop.f32.mrf.mxu0
    %v2235 = vadd.f32 %v2146, %v2234
    %2236 = vmatmul.bf16.gmra.mxu0 %v1968
    %v2237 = vpop.f32.mrf.mxu0
    %v2238 = vadd.f32 %v2149, %v2237
    %v2239 = vpop.f32.mrf.mxu0
    %v2240 = vadd.f32 %v2151, %v2239
    %2241 = vmatmul.bf16.gmra.mxu0 %v1970
    %v2242 = vpop.f32.mrf.mxu0
    %v2243 = vadd.f32 %v2154, %v2242
    %v2244 = vpop.f32.mrf.mxu0
    %v2245 = vadd.f32 %v2156, %v2244
    %2246 = vmatmul.bf16.gmra.mxu0 %v1972
    %v2247 = vpop.f32.mrf.mxu0
    %v2248 = vadd.f32 %v2159, %v2247
    %v2249 = vpop.f32.mrf.mxu0
    %v2250 = vadd.f32 %v2161, %v2249
    %2251 = vmatmul.bf16.gmra.mxu0 %v1974
    %v2252 = vpop.f32.mrf.mxu0
    %v2253 = vadd.f32 %v2164, %v2252
    %v2254 = vpop.f32.mrf.mxu0
    %v2255 = vadd.f32 %v2166, %v2254
    %2256 = vmatmul.bf16.gmra.mxu0 %v1976
    %v2257 = vpop.f32.mrf.mxu0
    %v2258 = vadd.f32 %v2169, %v2257
    %v2259 = vpop.f32.mrf.mxu0
    %v2260 = vadd.f32 %v2171, %v2259
    %2261 = vmatmul.bf16.gmra.mxu0 %v1978
    %v2262 = vpop.f32.mrf.mxu0
    %v2263 = vadd.f32 %v2174, %v2262
    %v2264 = vpop.f32.mrf.mxu0
    %v2265 = vadd.f32 %v2176, %v2264
    %2266 = vmatmul.bf16.gmra.mxu0 %v1980
    %v2267 = vpop.f32.mrf.mxu0
    %v2268 = vadd.f32 %v2179, %v2267
    %v2269 = vpop.f32.mrf.mxu0
    %v2270 = vadd.f32 %v2181, %v2269
    %2271 = vmatmul.bf16.gmra.mxu0 %v1982
    %v2272 = vpop.f32.mrf.mxu0
    %v2273 = vadd.f32 %v2184, %v2272
    %v2274 = vpop.f32.mrf.mxu0
    %v2275 = vadd.f32 %v2186, %v2274
    %2276 = vmatmul.bf16.gmra.mxu0 %v1984
    %v2277 = vpop.f32.mrf.mxu0
    %v2278 = vadd.f32 %v2189, %v2277
    %v2279 = vpop.f32.mrf.mxu0
    %v2280 = vadd.f32 %v2191, %v2279
    %2281 = vmatmul.bf16.gmra.mxu0 %v1986
    %v2282 = vpop.f32.mrf.mxu0
    %v2283 = vadd.f32 %v2194, %v2282
    %v2284 = vpop.f32.mrf.mxu0
    %v2285 = vadd.f32 %v2196, %v2284
    %2286 = vmatmul.bf16.gmra.mxu0 %v1988
    %v2287 = vpop.f32.mrf.mxu0
    %v2288 = vadd.f32 %v2199, %v2287
    %v2289 = vpop.f32.mrf.mxu0
    %v2290 = vadd.f32 %v2201, %v2289
    %2291 = vmatmul.bf16.gmra.mxu0 %v1990
    %v2292 = vpop.f32.mrf.mxu0
    %v2293 = vadd.f32 %v2204, %v2292
    %v2294 = vpop.f32.mrf.mxu0
    %v2295 = vadd.f32 %v2206, %v2294
    %2296 = vdwg.mxu0
    %v2297 = vpack.c.bf16 %v2218, %v2218
    %v2298 = vpack.c.bf16 %v2220, %v2220
    %v2299 = vpack.c.bf16 %v2223, %v2223
    %v2300 = vpack.c.bf16 %v2225, %v2225
    %v2301 = vpack.c.bf16 %v2228, %v2228
    %v2302 = vpack.c.bf16 %v2230, %v2230
    %v2303 = vpack.c.bf16 %v2233, %v2233
    %v2304 = vpack.c.bf16 %v2235, %v2235
    %v2305 = vpack.c.bf16 %v2238, %v2238
    %v2306 = vpack.c.bf16 %v2240, %v2240
    %v2307 = vpack.c.bf16 %v2243, %v2243
    %v2308 = vpack.c.bf16 %v2245, %v2245
    %v2309 = vpack.c.bf16 %v2248, %v2248
    %v2310 = vpack.c.bf16 %v2250, %v2250
    %v2311 = vpack.c.bf16 %v2253, %v2253
    %v2312 = vpack.c.bf16 %v2255, %v2255
    %v2313 = vpack.c.bf16 %v2258, %v2258
    %v2314 = vpack.c.bf16 %v2260, %v2260
    %v2315 = vpack.c.bf16 %v2263, %v2263
    %v2316 = vpack.c.bf16 %v2265, %v2265
    %v2317 = vpack.c.bf16 %v2268, %v2268
    %v2318 = vpack.c.bf16 %v2270, %v2270
    %v2319 = vpack.c.bf16 %v2273, %v2273
    %v2320 = vpack.c.bf16 %v2275, %v2275
    %v2321 = vpack.c.bf16 %v2278, %v2278
    %v2322 = vpack.c.bf16 %v2280, %v2280
    %v2323 = vpack.c.bf16 %v2283, %v2283
    %v2324 = vpack.c.bf16 %v2285, %v2285
    %v2325 = vpack.c.bf16 %v2288, %v2288
    %v2326 = vpack.c.bf16 %v2290, %v2290
    %v2327 = vpack.c.bf16 %v2293, %v2293
    %v2328 = vpack.c.bf16 %v2295, %v2295
    %v2329 = vld [vmem:[%s6] sm:$0xf]
    %v2330 = vld [vmem:[%s6 + $0x4] sm:$0xf]
    %v2331 = vld [vmem:[%s6 + $0x8] sm:$0xf]
    %v2332 = vld [vmem:[%s6 + $0xc] sm:$0xf]
    %v2333 = vld [vmem:[%s6 + $0x10] sm:$0xf]
    %v2334 = vld [vmem:[%s6 + $0x14] sm:$0xf]
    %v2335 = vld [vmem:[%s6 + $0x18] sm:$0xf]
    %v2336 = vld [vmem:[%s6 + $0x1c] sm:$0xf]
    %v2337 = vld [vmem:[%s6 + $0x20] sm:$0xf]
    %v2338 = vld [vmem:[%s6 + $0x24] sm:$0xf]
    %v2339 = vld [vmem:[%s6 + $0x28] sm:$0xf]
    %v2340 = vld [vmem:[%s6 + $0x2c] sm:$0xf]
    %v2341 = vld [vmem:[%s6 + $0x30] sm:$0xf]
    %v2342 = vld [vmem:[%s6 + $0x34] sm:$0xf]
    %v2343 = vld [vmem:[%s6 + $0x38] sm:$0xf]
    %v2344 = vld [vmem:[%s6 + $0x3c] sm:$0xf]
    %v2345 = vld [vmem:[%s6 + $0x40] sm:$0xf]
    %v2346 = vld [vmem:[%s6 + $0x44] sm:$0xf]
    %v2347 = vld [vmem:[%s6 + $0x48] sm:$0xf]
    %v2348 = vld [vmem:[%s6 + $0x4c] sm:$0xf]
    %v2349 = vld [vmem:[%s6 + $0x50] sm:$0xf]
    %v2350 = vld [vmem:[%s6 + $0x54] sm:$0xf]
    %v2351 = vld [vmem:[%s6 + $0x58] sm:$0xf]
    %v2352 = vld [vmem:[%s6 + $0x5c] sm:$0xf]
    %v2353 = vld [vmem:[%s6 + $0x60] sm:$0xf]
    %v2354 = vld [vmem:[%s6 + $0x64] sm:$0xf]
    %v2355 = vld [vmem:[%s6 + $0x68] sm:$0xf]
    %v2356 = vld [vmem:[%s6 + $0x6c] sm:$0xf]
    %v2357 = vld [vmem:[%s6 + $0x70] sm:$0xf]
    %v2358 = vld [vmem:[%s6 + $0x74] sm:$0xf]
    %v2359 = vld [vmem:[%s6 + $0x78] sm:$0xf]
    %v2360 = vld [vmem:[%s6 + $0x7c] sm:$0xf]
    %2362 = vset.pattern.permute.xlu0 0
    %2363 = vperm.xlu0 %2362, %v2329
    %v2364 = vpop.permute.xlu0 %2363
    %v2367 = vunpack.c.l.s4 839922192
    %v2368 = vunpack.c.0.s8 %v2367
    %v2369 = vperm.slane %v2364, %v2368
    %2371 = vset.pattern.permute.xlu0 0
    %2372 = vperm.xlu0 %2371, %v2330
    %v2373 = vpop.permute.xlu0 %2372
    %v2376 = vunpack.c.l.s4 839922192
    %v2377 = vunpack.c.0.s8 %v2376
    %v2378 = vperm.slane %v2373, %v2377
    %2380 = vset.pattern.permute.xlu0 0
    %2381 = vperm.xlu0 %2380, %v2331
    %v2382 = vpop.permute.xlu0 %2381
    %v2385 = vunpack.c.l.s4 839922192
    %v2386 = vunpack.c.0.s8 %v2385
    %v2387 = vperm.slane %v2382, %v2386
    %2389 = vset.pattern.permute.xlu0 0
    %2390 = vperm.xlu0 %2389, %v2332
    %v2391 = vpop.permute.xlu0 %2390
    %v2394 = vunpack.c.l.s4 839922192
    %v2395 = vunpack.c.0.s8 %v2394
    %v2396 = vperm.slane %v2391, %v2395
    %2398 = vset.pattern.permute.xlu0 0
    %2399 = vperm.xlu0 %2398, %v2333
    %v2400 = vpop.permute.xlu0 %2399
    %v2403 = vunpack.c.l.s4 839922192
    %v2404 = vunpack.c.0.s8 %v2403
    %v2405 = vperm.slane %v2400, %v2404
    %2407 = vset.pattern.permute.xlu0 0
    %2408 = vperm.xlu0 %2407, %v2334
    %v2409 = vpop.permute.xlu0 %2408
    %v2412 = vunpack.c.l.s4 839922192
    %v2413 = vunpack.c.0.s8 %v2412
    %v2414 = vperm.slane %v2409, %v2413
    %2416 = vset.pattern.permute.xlu0 0
    %2417 = vperm.xlu0 %2416, %v2335
    %v2418 = vpop.permute.xlu0 %2417
    %v2421 = vunpack.c.l.s4 839922192
    %v2422 = vunpack.c.0.s8 %v2421
    %v2423 = vperm.slane %v2418, %v2422
    %2425 = vset.pattern.permute.xlu0 0
    %2426 = vperm.xlu0 %2425, %v2336
    %v2427 = vpop.permute.xlu0 %2426
    %v2430 = vunpack.c.l.s4 839922192
    %v2431 = vunpack.c.0.s8 %v2430
    %v2432 = vperm.slane %v2427, %v2431
    %2434 = vset.pattern.permute.xlu0 0
    %2435 = vperm.xlu0 %2434, %v2337
    %v2436 = vpop.permute.xlu0 %2435
    %v2439 = vunpack.c.l.s4 839922192
    %v2440 = vunpack.c.0.s8 %v2439
    %v2441 = vperm.slane %v2436, %v2440
    %2443 = vset.pattern.permute.xlu0 0
    %2444 = vperm.xlu0 %2443, %v2338
    %v2445 = vpop.permute.xlu0 %2444
    %v2448 = vunpack.c.l.s4 839922192
    %v2449 = vunpack.c.0.s8 %v2448
    %v2450 = vperm.slane %v2445, %v2449
    %2452 = vset.pattern.permute.xlu0 0
    %2453 = vperm.xlu0 %2452, %v2339
    %v2454 = vpop.permute.xlu0 %2453
    %v2457 = vunpack.c.l.s4 839922192
    %v2458 = vunpack.c.0.s8 %v2457
    %v2459 = vperm.slane %v2454, %v2458
    %2461 = vset.pattern.permute.xlu0 0
    %2462 = vperm.xlu0 %2461, %v2340
    %v2463 = vpop.permute.xlu0 %2462
    %v2466 = vunpack.c.l.s4 839922192
    %v2467 = vunpack.c.0.s8 %v2466
    %v2468 = vperm.slane %v2463, %v2467
    %2470 = vset.pattern.permute.xlu0 0
    %2471 = vperm.xlu0 %2470, %v2341
    %v2472 = vpop.permute.xlu0 %2471
    %v2475 = vunpack.c.l.s4 839922192
    %v2476 = vunpack.c.0.s8 %v2475
    %v2477 = vperm.slane %v2472, %v2476
    %2479 = vset.pattern.permute.xlu0 0
    %2480 = vperm.xlu0 %2479, %v2342
    %v2481 = vpop.permute.xlu0 %2480
    %v2484 = vunpack.c.l.s4 839922192
    %v2485 = vunpack.c.0.s8 %v2484
    %v2486 = vperm.slane %v2481, %v2485
    %2488 = vset.pattern.permute.xlu0 0
    %2489 = vperm.xlu0 %2488, %v2343
    %v2490 = vpop.permute.xlu0 %2489
    %v2493 = vunpack.c.l.s4 839922192
    %v2494 = vunpack.c.0.s8 %v2493
    %v2495 = vperm.slane %v2490, %v2494
    %2497 = vset.pattern.permute.xlu0 0
    %2498 = vperm.xlu0 %2497, %v2344
    %v2499 = vpop.permute.xlu0 %2498
    %v2502 = vunpack.c.l.s4 839922192
    %v2503 = vunpack.c.0.s8 %v2502
    %v2504 = vperm.slane %v2499, %v2503
    %2506 = vset.pattern.permute.xlu0 0
    %2507 = vperm.xlu0 %2506, %v2345
    %v2508 = vpop.permute.xlu0 %2507
    %v2511 = vunpack.c.l.s4 839922192
    %v2512 = vunpack.c.0.s8 %v2511
    %v2513 = vperm.slane %v2508, %v2512
    %2515 = vset.pattern.permute.xlu0 0
    %2516 = vperm.xlu0 %2515, %v2346
    %v2517 = vpop.permute.xlu0 %2516
    %v2520 = vunpack.c.l.s4 839922192
    %v2521 = vunpack.c.0.s8 %v2520
    %v2522 = vperm.slane %v2517, %v2521
    %2524 = vset.pattern.permute.xlu0 0
    %2525 = vperm.xlu0 %2524, %v2347
    %v2526 = vpop.permute.xlu0 %2525
    %v2529 = vunpack.c.l.s4 839922192
    %v2530 = vunpack.c.0.s8 %v2529
    %v2531 = vperm.slane %v2526, %v2530
    %2533 = vset.pattern.permute.xlu0 0
    %2534 = vperm.xlu0 %2533, %v2348
    %v2535 = vpop.permute.xlu0 %2534
    %v2538 = vunpack.c.l.s4 839922192
    %v2539 = vunpack.c.0.s8 %v2538
    %v2540 = vperm.slane %v2535, %v2539
    %2542 = vset.pattern.permute.xlu0 0
    %2543 = vperm.xlu0 %2542, %v2349
    %v2544 = vpop.permute.xlu0 %2543
    %v2547 = vunpack.c.l.s4 839922192
    %v2548 = vunpack.c.0.s8 %v2547
    %v2549 = vperm.slane %v2544, %v2548
    %2551 = vset.pattern.permute.xlu0 0
    %2552 = vperm.xlu0 %2551, %v2350
    %v2553 = vpop.permute.xlu0 %2552
    %v2556 = vunpack.c.l.s4 839922192
    %v2557 = vunpack.c.0.s8 %v2556
    %v2558 = vperm.slane %v2553, %v2557
    %2560 = vset.pattern.permute.xlu0 0
    %2561 = vperm.xlu0 %2560, %v2351
    %v2562 = vpop.permute.xlu0 %2561
    %v2565 = vunpack.c.l.s4 839922192
    %v2566 = vunpack.c.0.s8 %v2565
    %v2567 = vperm.slane %v2562, %v2566
    %2569 = vset.pattern.permute.xlu0 0
    %2570 = vperm.xlu0 %2569, %v2352
    %v2571 = vpop.permute.xlu0 %2570
    %v2574 = vunpack.c.l.s4 839922192
    %v2575 = vunpack.c.0.s8 %v2574
    %v2576 = vperm.slane %v2571, %v2575
    %2578 = vset.pattern.permute.xlu0 0
    %2579 = vperm.xlu0 %2578, %v2353
    %v2580 = vpop.permute.xlu0 %2579
    %v2583 = vunpack.c.l.s4 839922192
    %v2584 = vunpack.c.0.s8 %v2583
    %v2585 = vperm.slane %v2580, %v2584
    %2587 = vset.pattern.permute.xlu0 0
    %2588 = vperm.xlu0 %2587, %v2354
    %v2589 = vpop.permute.xlu0 %2588
    %v2592 = vunpack.c.l.s4 839922192
    %v2593 = vunpack.c.0.s8 %v2592
    %v2594 = vperm.slane %v2589, %v2593
    %2596 = vset.pattern.permute.xlu0 0
    %2597 = vperm.xlu0 %2596, %v2355
    %v2598 = vpop.permute.xlu0 %2597
    %v2601 = vunpack.c.l.s4 839922192
    %v2602 = vunpack.c.0.s8 %v2601
    %v2603 = vperm.slane %v2598, %v2602
    %2605 = vset.pattern.permute.xlu0 0
    %2606 = vperm.xlu0 %2605, %v2356
    %v2607 = vpop.permute.xlu0 %2606
    %v2610 = vunpack.c.l.s4 839922192
    %v2611 = vunpack.c.0.s8 %v2610
    %v2612 = vperm.slane %v2607, %v2611
    %2614 = vset.pattern.permute.xlu0 0
    %2615 = vperm.xlu0 %2614, %v2357
    %v2616 = vpop.permute.xlu0 %2615
    %v2619 = vunpack.c.l.s4 839922192
    %v2620 = vunpack.c.0.s8 %v2619
    %v2621 = vperm.slane %v2616, %v2620
    %2623 = vset.pattern.permute.xlu0 0
    %2624 = vperm.xlu0 %2623, %v2358
    %v2625 = vpop.permute.xlu0 %2624
    %v2628 = vunpack.c.l.s4 839922192
    %v2629 = vunpack.c.0.s8 %v2628
    %v2630 = vperm.slane %v2625, %v2629
    %2632 = vset.pattern.permute.xlu0 0
    %2633 = vperm.xlu0 %2632, %v2359
    %v2634 = vpop.permute.xlu0 %2633
    %v2637 = vunpack.c.l.s4 839922192
    %v2638 = vunpack.c.0.s8 %v2637
    %v2639 = vperm.slane %v2634, %v2638
    %2641 = vset.pattern.permute.xlu0 0
    %2642 = vperm.xlu0 %2641, %v2360
    %v2643 = vpop.permute.xlu0 %2642
    %v2646 = vunpack.c.l.s4 839922192
    %v2647 = vunpack.c.0.s8 %v2646
    %v2648 = vperm.slane %v2643, %v2647
    %v2649 = vunpack.c.l.bf16 %v2297
    %v2650 = vunpack.c.l.bf16 %v2298
    %v2651 = vunpack.c.l.bf16 %v2299
    %v2652 = vunpack.c.l.bf16 %v2300
    %v2653 = vunpack.c.l.bf16 %v2301
    %v2654 = vunpack.c.l.bf16 %v2302
    %v2655 = vunpack.c.l.bf16 %v2303
    %v2656 = vunpack.c.l.bf16 %v2304
    %v2657 = vunpack.c.l.bf16 %v2305
    %v2658 = vunpack.c.l.bf16 %v2306
    %v2659 = vunpack.c.l.bf16 %v2307
    %v2660 = vunpack.c.l.bf16 %v2308
    %v2661 = vunpack.c.l.bf16 %v2309
    %v2662 = vunpack.c.l.bf16 %v2310
    %v2663 = vunpack.c.l.bf16 %v2311
    %v2664 = vunpack.c.l.bf16 %v2312
    %v2665 = vunpack.c.l.bf16 %v2313
    %v2666 = vunpack.c.l.bf16 %v2314
    %v2667 = vunpack.c.l.bf16 %v2315
    %v2668 = vunpack.c.l.bf16 %v2316
    %v2669 = vunpack.c.l.bf16 %v2317
    %v2670 = vunpack.c.l.bf16 %v2318
    %v2671 = vunpack.c.l.bf16 %v2319
    %v2672 = vunpack.c.l.bf16 %v2320
    %v2673 = vunpack.c.l.bf16 %v2321
    %v2674 = vunpack.c.l.bf16 %v2322
    %v2675 = vunpack.c.l.bf16 %v2323
    %v2676 = vunpack.c.l.bf16 %v2324
    %v2677 = vunpack.c.l.bf16 %v2325
    %v2678 = vunpack.c.l.bf16 %v2326
    %v2679 = vunpack.c.l.bf16 %v2327
    %v2680 = vunpack.c.l.bf16 %v2328
    %v2681 = vunpack.c.l.bf16 %v2369
    %v2682 = vunpack.c.l.bf16 %v2378
    %v2683 = vunpack.c.l.bf16 %v2387
    %v2684 = vunpack.c.l.bf16 %v2396
    %v2685 = vunpack.c.l.bf16 %v2405
    %v2686 = vunpack.c.l.bf16 %v2414
    %v2687 = vunpack.c.l.bf16 %v2423
    %v2688 = vunpack.c.l.bf16 %v2432
    %v2689 = vunpack.c.l.bf16 %v2441
    %v2690 = vunpack.c.l.bf16 %v2450
    %v2691 = vunpack.c.l.bf16 %v2459
    %v2692 = vunpack.c.l.bf16 %v2468
    %v2693 = vunpack.c.l.bf16 %v2477
    %v2694 = vunpack.c.l.bf16 %v2486
    %v2695 = vunpack.c.l.bf16 %v2495
    %v2696 = vunpack.c.l.bf16 %v2504
    %v2697 = vunpack.c.l.bf16 %v2513
    %v2698 = vunpack.c.l.bf16 %v2522
    %v2699 = vunpack.c.l.bf16 %v2531
    %v2700 = vunpack.c.l.bf16 %v2540
    %v2701 = vunpack.c.l.bf16 %v2549
    %v2702 = vunpack.c.l.bf16 %v2558
    %v2703 = vunpack.c.l.bf16 %v2567
    %v2704 = vunpack.c.l.bf16 %v2576
    %v2705 = vunpack.c.l.bf16 %v2585
    %v2706 = vunpack.c.l.bf16 %v2594
    %v2707 = vunpack.c.l.bf16 %v2603
    %v2708 = vunpack.c.l.bf16 %v2612
    %v2709 = vunpack.c.l.bf16 %v2621
    %v2710 = vunpack.c.l.bf16 %v2630
    %v2711 = vunpack.c.l.bf16 %v2639
    %v2712 = vunpack.c.l.bf16 %v2648
    %v2713 = vadd.f32 %v2649, %v2681
    %v2714 = vadd.f32 %v2650, %v2682
    %v2715 = vadd.f32 %v2651, %v2683
    %v2716 = vadd.f32 %v2652, %v2684
    %v2717 = vadd.f32 %v2653, %v2685
    %v2718 = vadd.f32 %v2654, %v2686
    %v2719 = vadd.f32 %v2655, %v2687
    %v2720 = vadd.f32 %v2656, %v2688
    %v2721 = vadd.f32 %v2657, %v2689
    %v2722 = vadd.f32 %v2658, %v2690
    %v2723 = vadd.f32 %v2659, %v2691
    %v2724 = vadd.f32 %v2660, %v2692
    %v2725 = vadd.f32 %v2661, %v2693
    %v2726 = vadd.f32 %v2662, %v2694
    %v2727 = vadd.f32 %v2663, %v2695
    %v2728 = vadd.f32 %v2664, %v2696
    %v2729 = vadd.f32 %v2665, %v2697
    %v2730 = vadd.f32 %v2666, %v2698
    %v2731 = vadd.f32 %v2667, %v2699
    %v2732 = vadd.f32 %v2668, %v2700
    %v2733 = vadd.f32 %v2669, %v2701
    %v2734 = vadd.f32 %v2670, %v2702
    %v2735 = vadd.f32 %v2671, %v2703
    %v2736 = vadd.f32 %v2672, %v2704
    %v2737 = vadd.f32 %v2673, %v2705
    %v2738 = vadd.f32 %v2674, %v2706
    %v2739 = vadd.f32 %v2675, %v2707
    %v2740 = vadd.f32 %v2676, %v2708
    %v2741 = vadd.f32 %v2677, %v2709
    %v2742 = vadd.f32 %v2678, %v2710
    %v2743 = vadd.f32 %v2679, %v2711
    %v2744 = vadd.f32 %v2680, %v2712
    %v2745 = vpack.c.bf16 %v2713, %v2713
    %v2746 = vpack.c.bf16 %v2714, %v2714
    %v2747 = vpack.c.bf16 %v2715, %v2715
    %v2748 = vpack.c.bf16 %v2716, %v2716
    %v2749 = vpack.c.bf16 %v2717, %v2717
    %v2750 = vpack.c.bf16 %v2718, %v2718
    %v2751 = vpack.c.bf16 %v2719, %v2719
    %v2752 = vpack.c.bf16 %v2720, %v2720
    %v2753 = vpack.c.bf16 %v2721, %v2721
    %v2754 = vpack.c.bf16 %v2722, %v2722
    %v2755 = vpack.c.bf16 %v2723, %v2723
    %v2756 = vpack.c.bf16 %v2724, %v2724
    %v2757 = vpack.c.bf16 %v2725, %v2725
    %v2758 = vpack.c.bf16 %v2726, %v2726
    %v2759 = vpack.c.bf16 %v2727, %v2727
    %v2760 = vpack.c.bf16 %v2728, %v2728
    %v2761 = vpack.c.bf16 %v2729, %v2729
    %v2762 = vpack.c.bf16 %v2730, %v2730
    %v2763 = vpack.c.bf16 %v2731, %v2731
    %v2764 = vpack.c.bf16 %v2732, %v2732
    %v2765 = vpack.c.bf16 %v2733, %v2733
    %v2766 = vpack.c.bf16 %v2734, %v2734
    %v2767 = vpack.c.bf16 %v2735, %v2735
    %v2768 = vpack.c.bf16 %v2736, %v2736
    %v2769 = vpack.c.bf16 %v2737, %v2737
    %v2770 = vpack.c.bf16 %v2738, %v2738
    %v2771 = vpack.c.bf16 %v2739, %v2739
    %v2772 = vpack.c.bf16 %v2740, %v2740
    %v2773 = vpack.c.bf16 %v2741, %v2741
    %v2774 = vpack.c.bf16 %v2742, %v2742
    %v2775 = vpack.c.bf16 %v2743, %v2743
    %v2776 = vpack.c.bf16 %v2744, %v2744
    %v2777 = vunpack.c.l.bf16 %v2745
    %v2778 = vunpack.c.l.bf16 %v2746
    %v2779 = vunpack.c.l.bf16 %v2747
    %v2780 = vunpack.c.l.bf16 %v2748
    %v2781 = vunpack.c.l.bf16 %v2749
    %v2782 = vunpack.c.l.bf16 %v2750
    %v2783 = vunpack.c.l.bf16 %v2751
    %v2784 = vunpack.c.l.bf16 %v2752
    %v2785 = vunpack.c.l.bf16 %v2753
    %v2786 = vunpack.c.l.bf16 %v2754
    %v2787 = vunpack.c.l.bf16 %v2755
    %v2788 = vunpack.c.l.bf16 %v2756
    %v2789 = vunpack.c.l.bf16 %v2757
    %v2790 = vunpack.c.l.bf16 %v2758
    %v2791 = vunpack.c.l.bf16 %v2759
    %v2792 = vunpack.c.l.bf16 %v2760
    %v2793 = vunpack.c.l.bf16 %v2761
    %v2794 = vunpack.c.l.bf16 %v2762
    %v2795 = vunpack.c.l.bf16 %v2763
    %v2796 = vunpack.c.l.bf16 %v2764
    %v2797 = vunpack.c.l.bf16 %v2765
    %v2798 = vunpack.c.l.bf16 %v2766
    %v2799 = vunpack.c.l.bf16 %v2767
    %v2800 = vunpack.c.l.bf16 %v2768
    %v2801 = vunpack.c.l.bf16 %v2769
    %v2802 = vunpack.c.l.bf16 %v2770
    %v2803 = vunpack.c.l.bf16 %v2771
    %v2804 = vunpack.c.l.bf16 %v2772
    %v2805 = vunpack.c.l.bf16 %v2773
    %v2806 = vunpack.c.l.bf16 %v2774
    %v2807 = vunpack.c.l.bf16 %v2775
    %v2808 = vunpack.c.l.bf16 %v2776
    %vm2809 = vcmp.gt.f32.partialorder %v2777, 0.0
    %vm2810 = vcmp.gt.f32.partialorder %v2778, 0.0
    %vm2811 = vcmp.gt.f32.partialorder %v2779, 0.0
    %vm2812 = vcmp.gt.f32.partialorder %v2780, 0.0
    %vm2813 = vcmp.gt.f32.partialorder %v2781, 0.0
    %vm2814 = vcmp.gt.f32.partialorder %v2782, 0.0
    %vm2815 = vcmp.gt.f32.partialorder %v2783, 0.0
    %vm2816 = vcmp.gt.f32.partialorder %v2784, 0.0
    %vm2817 = vcmp.gt.f32.partialorder %v2785, 0.0
    %vm2818 = vcmp.gt.f32.partialorder %v2786, 0.0
    %vm2819 = vcmp.gt.f32.partialorder %v2787, 0.0
    %vm2820 = vcmp.gt.f32.partialorder %v2788, 0.0
    %vm2821 = vcmp.gt.f32.partialorder %v2789, 0.0
    %vm2822 = vcmp.gt.f32.partialorder %v2790, 0.0
    %vm2823 = vcmp.gt.f32.partialorder %v2791, 0.0
    %vm2824 = vcmp.gt.f32.partialorder %v2792, 0.0
    %vm2825 = vcmp.gt.f32.partialorder %v2793, 0.0
    %vm2826 = vcmp.gt.f32.partialorder %v2794, 0.0
    %vm2827 = vcmp.gt.f32.partialorder %v2795, 0.0
    %vm2828 = vcmp.gt.f32.partialorder %v2796, 0.0
    %vm2829 = vcmp.gt.f32.partialorder %v2797, 0.0
    %vm2830 = vcmp.gt.f32.partialorder %v2798, 0.0
    %vm2831 = vcmp.gt.f32.partialorder %v2799, 0.0
    %vm2832 = vcmp.gt.f32.partialorder %v2800, 0.0
    %vm2833 = vcmp.gt.f32.partialorder %v2801, 0.0
    %vm2834 = vcmp.gt.f32.partialorder %v2802, 0.0
    %vm2835 = vcmp.gt.f32.partialorder %v2803, 0.0
    %vm2836 = vcmp.gt.f32.partialorder %v2804, 0.0
    %vm2837 = vcmp.gt.f32.partialorder %v2805, 0.0
    %vm2838 = vcmp.gt.f32.partialorder %v2806, 0.0
    %vm2839 = vcmp.gt.f32.partialorder %v2807, 0.0
    %vm2840 = vcmp.gt.f32.partialorder %v2808, 0.0
    %v2841 = vmul.f32 %v2777, 0.20019531
    %v2842 = vmul.f32 %v2778, 0.20019531
    %v2843 = vmul.f32 %v2779, 0.20019531
    %v2844 = vmul.f32 %v2780, 0.20019531
    %v2845 = vmul.f32 %v2781, 0.20019531
    %v2846 = vmul.f32 %v2782, 0.20019531
    %v2847 = vmul.f32 %v2783, 0.20019531
    %v2848 = vmul.f32 %v2784, 0.20019531
    %v2849 = vmul.f32 %v2785, 0.20019531
    %v2850 = vmul.f32 %v2786, 0.20019531
    %v2851 = vmul.f32 %v2787, 0.20019531
    %v2852 = vmul.f32 %v2788, 0.20019531
    %v2853 = vmul.f32 %v2789, 0.20019531
    %v2854 = vmul.f32 %v2790, 0.20019531
    %v2855 = vmul.f32 %v2791, 0.20019531
    %v2856 = vmul.f32 %v2792, 0.20019531
    %v2857 = vmul.f32 %v2793, 0.20019531
    %v2858 = vmul.f32 %v2794, 0.20019531
    %v2859 = vmul.f32 %v2795, 0.20019531
    %v2860 = vmul.f32 %v2796, 0.20019531
    %v2861 = vmul.f32 %v2797, 0.20019531
    %v2862 = vmul.f32 %v2798, 0.20019531
    %v2863 = vmul.f32 %v2799, 0.20019531
    %v2864 = vmul.f32 %v2800, 0.20019531
    %v2865 = vmul.f32 %v2801, 0.20019531
    %v2866 = vmul.f32 %v2802, 0.20019531
    %v2867 = vmul.f32 %v2803, 0.20019531
    %v2868 = vmul.f32 %v2804, 0.20019531
    %v2869 = vmul.f32 %v2805, 0.20019531
    %v2870 = vmul.f32 %v2806, 0.20019531
    %v2871 = vmul.f32 %v2807, 0.20019531
    %v2872 = vmul.f32 %v2808, 0.20019531
    %v2873 = vpack.c.bf16 %v2841, %v2841
    %v2874 = vpack.c.bf16 %v2842, %v2842
    %v2875 = vpack.c.bf16 %v2843, %v2843
    %v2876 = vpack.c.bf16 %v2844, %v2844
    %v2877 = vpack.c.bf16 %v2845, %v2845
    %v2878 = vpack.c.bf16 %v2846, %v2846
    %v2879 = vpack.c.bf16 %v2847, %v2847
    %v2880 = vpack.c.bf16 %v2848, %v2848
    %v2881 = vpack.c.bf16 %v2849, %v2849
    %v2882 = vpack.c.bf16 %v2850, %v2850
    %v2883 = vpack.c.bf16 %v2851, %v2851
    %v2884 = vpack.c.bf16 %v2852, %v2852
    %v2885 = vpack.c.bf16 %v2853, %v2853
    %v2886 = vpack.c.bf16 %v2854, %v2854
    %v2887 = vpack.c.bf16 %v2855, %v2855
    %v2888 = vpack.c.bf16 %v2856, %v2856
    %v2889 = vpack.c.bf16 %v2857, %v2857
    %v2890 = vpack.c.bf16 %v2858, %v2858
    %v2891 = vpack.c.bf16 %v2859, %v2859
    %v2892 = vpack.c.bf16 %v2860, %v2860
    %v2893 = vpack.c.bf16 %v2861, %v2861
    %v2894 = vpack.c.bf16 %v2862, %v2862
    %v2895 = vpack.c.bf16 %v2863, %v2863
    %v2896 = vpack.c.bf16 %v2864, %v2864
    %v2897 = vpack.c.bf16 %v2865, %v2865
    %v2898 = vpack.c.bf16 %v2866, %v2866
    %v2899 = vpack.c.bf16 %v2867, %v2867
    %v2900 = vpack.c.bf16 %v2868, %v2868
    %v2901 = vpack.c.bf16 %v2869, %v2869
    %v2902 = vpack.c.bf16 %v2870, %v2870
    %v2903 = vpack.c.bf16 %v2871, %v2871
    %v2904 = vpack.c.bf16 %v2872, %v2872
    %vm2905 = vmpackc.low %vm2809, %vm2809
    %vm2906 = vmpackc.low %vm2810, %vm2810
    %vm2907 = vmpackc.low %vm2811, %vm2811
    %vm2908 = vmpackc.low %vm2812, %vm2812
    %vm2909 = vmpackc.low %vm2813, %vm2813
    %vm2910 = vmpackc.low %vm2814, %vm2814
    %vm2911 = vmpackc.low %vm2815, %vm2815
    %vm2912 = vmpackc.low %vm2816, %vm2816
    %vm2913 = vmpackc.low %vm2817, %vm2817
    %vm2914 = vmpackc.low %vm2818, %vm2818
    %vm2915 = vmpackc.low %vm2819, %vm2819
    %vm2916 = vmpackc.low %vm2820, %vm2820
    %vm2917 = vmpackc.low %vm2821, %vm2821
    %vm2918 = vmpackc.low %vm2822, %vm2822
    %vm2919 = vmpackc.low %vm2823, %vm2823
    %vm2920 = vmpackc.low %vm2824, %vm2824
    %vm2921 = vmpackc.low %vm2825, %vm2825
    %vm2922 = vmpackc.low %vm2826, %vm2826
    %vm2923 = vmpackc.low %vm2827, %vm2827
    %vm2924 = vmpackc.low %vm2828, %vm2828
    %vm2925 = vmpackc.low %vm2829, %vm2829
    %vm2926 = vmpackc.low %vm2830, %vm2830
    %vm2927 = vmpackc.low %vm2831, %vm2831
    %vm2928 = vmpackc.low %vm2832, %vm2832
    %vm2929 = vmpackc.low %vm2833, %vm2833
    %vm2930 = vmpackc.low %vm2834, %vm2834
    %vm2931 = vmpackc.low %vm2835, %vm2835
    %vm2932 = vmpackc.low %vm2836, %vm2836
    %vm2933 = vmpackc.low %vm2837, %vm2837
    %vm2934 = vmpackc.low %vm2838, %vm2838
    %vm2935 = vmpackc.low %vm2839, %vm2839
    %vm2936 = vmpackc.low %vm2840, %vm2840
    %v2937 = vsel %vm2905, %v2745, %v2873
    %v2938 = vsel %vm2906, %v2746, %v2874
    %v2939 = vsel %vm2907, %v2747, %v2875
    %v2940 = vsel %vm2908, %v2748, %v2876
    %v2941 = vsel %vm2909, %v2749, %v2877
    %v2942 = vsel %vm2910, %v2750, %v2878
    %v2943 = vsel %vm2911, %v2751, %v2879
    %v2944 = vsel %vm2912, %v2752, %v2880
    %v2945 = vsel %vm2913, %v2753, %v2881
    %v2946 = vsel %vm2914, %v2754, %v2882
    %v2947 = vsel %vm2915, %v2755, %v2883
    %v2948 = vsel %vm2916, %v2756, %v2884
    %v2949 = vsel %vm2917, %v2757, %v2885
    %v2950 = vsel %vm2918, %v2758, %v2886
    %v2951 = vsel %vm2919, %v2759, %v2887
    %v2952 = vsel %vm2920, %v2760, %v2888
    %v2953 = vsel %vm2921, %v2761, %v2889
    %v2954 = vsel %vm2922, %v2762, %v2890
    %v2955 = vsel %vm2923, %v2763, %v2891
    %v2956 = vsel %vm2924, %v2764, %v2892
    %v2957 = vsel %vm2925, %v2765, %v2893
    %v2958 = vsel %vm2926, %v2766, %v2894
    %v2959 = vsel %vm2927, %v2767, %v2895
    %v2960 = vsel %vm2928, %v2768, %v2896
    %v2961 = vsel %vm2929, %v2769, %v2897
    %v2962 = vsel %vm2930, %v2770, %v2898
    %v2963 = vsel %vm2931, %v2771, %v2899
    %v2964 = vsel %vm2932, %v2772, %v2900
    %v2965 = vsel %vm2933, %v2773, %v2901
    %v2966 = vsel %vm2934, %v2774, %v2902
    %v2967 = vsel %vm2935, %v2775, %v2903
    %v2968 = vsel %vm2936, %v2776, %v2904
    %v2969 = vld [vmem:[%s7] sm:$0x3]
    %s2970 = sld [smem:[#allocation2]]
    %v2971 = vstv %s2970
    %2973 = vst [vmem:[#allocation1] ss:$9 sm:$0xff] %v2969
    %v2974 = vld [vmem:[#allocation1] sm:$0xff]
    %v2975 = vld [vmem:[#allocation1 + $0x9] sm:$0xff]
    %v3010 = vunpack.c.l.b16 %v2937
    %v3011 = vunpack.c.l.b16 %v2938
    %v3012 = vunpack.c.l.b16 %v2939
    %v3013 = vunpack.c.l.b16 %v2940
    %v3014 = vunpack.c.l.b16 %v2941
    %v3015 = vunpack.c.l.b16 %v2942
    %v3016 = vunpack.c.l.b16 %v2943
    %v3017 = vunpack.c.l.b16 %v2944
    %v3018 = vunpack.c.l.b16 %v2945
    %v3019 = vunpack.c.l.b16 %v2946
    %v3020 = vunpack.c.l.b16 %v2947
    %v3021 = vunpack.c.l.b16 %v2948
    %v3022 = vunpack.c.l.b16 %v2949
    %v3023 = vunpack.c.l.b16 %v2950
    %v3024 = vunpack.c.l.b16 %v2951
    %v3025 = vunpack.c.l.b16 %v2952
    %v3026 = vunpack.c.l.b16 %v2953
    %v3027 = vunpack.c.l.b16 %v2954
    %v3028 = vunpack.c.l.b16 %v2955
    %v3029 = vunpack.c.l.b16 %v2956
    %v3030 = vunpack.c.l.b16 %v2957
    %v3031 = vunpack.c.l.b16 %v2958
    %v3032 = vunpack.c.l.b16 %v2959
    %v3033 = vunpack.c.l.b16 %v2960
    %v3034 = vunpack.c.l.b16 %v2961
    %v3035 = vunpack.c.l.b16 %v2962
    %v3036 = vunpack.c.l.b16 %v2963
    %v3037 = vunpack.c.l.b16 %v2964
    %v3038 = vunpack.c.l.b16 %v2965
    %v3039 = vunpack.c.l.b16 %v2966
    %v3040 = vunpack.c.l.b16 %v2967
    %v3041 = vunpack.c.l.b16 %v2968
    %v3042 = vpack.c.b16 %v3011, %v3010
    %v3043 = vpack.c.b16 %v3013, %v3012
    %v3044 = vpack.c.b16 %v3015, %v3014
    %v3045 = vpack.c.b16 %v3017, %v3016
    %v3046 = vpack.c.b16 %v3019, %v3018
    %v3047 = vpack.c.b16 %v3021, %v3020
    %v3048 = vpack.c.b16 %v3023, %v3022
    %v3049 = vpack.c.b16 %v3025, %v3024
    %v3050 = vpack.c.b16 %v3027, %v3026
    %v3051 = vpack.c.b16 %v3029, %v3028
    %v3052 = vpack.c.b16 %v3031, %v3030
    %v3053 = vpack.c.b16 %v3033, %v3032
    %v3054 = vpack.c.b16 %v3035, %v3034
    %v3055 = vpack.c.b16 %v3037, %v3036
    %v3056 = vpack.c.b16 %v3039, %v3038
    %v3057 = vpack.c.b16 %v3041, %v3040
    %3074 = vmatpush.bf16.msra.mxu0 %v3049
    %3075 = vmatpush.bf16.msra.mxu0 %v3048
    %3076 = vmatpush.bf16.msra.mxu0 %v3047
    %3077 = vmatpush.bf16.msra.mxu0 %v3046
    %3078 = vmatpush.bf16.msra.mxu0 %v3045
    %3079 = vmatpush.bf16.msra.mxu0 %v3044
    %3080 = vmatpush.bf16.msra.mxu0 %v3043
    %3081 = vmatpush.bf16.msra.mxu0 %v3042
    %3082 = vmatmul.bf16.gmra.mxu0 %v2974
    %v3083 = vpop.f32.mrf.mxu0
    %v3084 = vadd.f32 %v2971, %v3083
    %v3085 = vpop.f32.mrf.mxu0
    %3086 = vdwg.mxu0
    %3087 = vmatpush.bf16.msra.mxu0 %v3057
    %3088 = vmatpush.bf16.msra.mxu0 %v3056
    %3089 = vmatpush.bf16.msra.mxu0 %v3055
    %3090 = vmatpush.bf16.msra.mxu0 %v3054
    %3091 = vmatpush.bf16.msra.mxu0 %v3053
    %3092 = vmatpush.bf16.msra.mxu0 %v3052
    %3093 = vmatpush.bf16.msra.mxu0 %v3051
    %3094 = vmatpush.bf16.msra.mxu0 %v3050
    %3095 = vmatmul.bf16.gmra.mxu0 %v2975
    %v3096 = vpop.f32.mrf.mxu0
    %v3097 = vadd.f32 %v3084, %v3096
    %v3098 = vpop.f32.mrf.mxu0
    %3099 = vdwg.mxu0
    %v3100 = vxor.u32 %v3097, 2147483648
    %v3101 = vmul.f32 %v3100, 1.442695
    %v3102 = vpow.pop %v3101
    %v3103 = vadd.f32 %v3102, 1.0
    %v3104 = vrcp.pop %v3103
    %v3105 = vmul.f32 %v3103, %v3104
    %v3106 = vsub.f32 1.0, %v3105
    %v3107 = vmul.f32 %v3104, %v3106
    %v3108 = vadd.f32 %v3104, %v3107
    %vm3109 = vweird.f32 %v3103
    %vm3110 = vweird.f32 %v3104
    %vm3111 = vmor %vm3109, %vm3110
    %v3112 = vsel %vm3111, %v3104, %v3108
    %v3113 = vand.u32 2147483647, %v3103
    %vm3114 = vcmp.eq.f32.partialorder %v3113, 8.507059e+37
    %v3115 = vand.u32 %v3103, 2147483648
    %v3116 = vor.u32 1.1754944e-38, %v3115
    %v3117 = vsel %vm3114, %v3116, %v3112
    %v3118 = vmul.f32 1.0, %v3117
    %3119 = vst [vmem:[#allocation3] sm:$0x1] %v3118
    // Predicated region
    $region38: #{tpu_custom_call.1} parent=1 // pred_check
      _
    $region39: #{tpu_custom_call.1} parent=1 // pred_check_branch
      %3121 = sbr.rel (0) target = $region41
    $region40: #{tpu_custom_call.1} parent=1 // pred_region
      %3123 = vsyncadd [#allocation4], 0
      %s3125 = sshll.u32 [#allocation3], 4
      %s3126 = int_to_ptr.vmem [resolvable:$true] %s3125
      %s3127 = sshll.u32 %s9, 4
      %s3128 = int_to_ptr.hbm [resolvable:$true] %s3127
      %3130 = dma.vmem_to_hbm [thread:$0]  %s3126, 16, %s3128, [#allocation4]
    $region41: #{tpu_custom_call.1} parent=1 // pred_fallthru
      _
    // Predicated region
    $region42: #{tpu_custom_call.1} parent=1 // pred_check
      _
    $region43: #{tpu_custom_call.1} parent=1 // pred_check_branch
      %3132 = sbr.rel (0) target = $region45
    $region44: #{tpu_custom_call.1} parent=1 // pred_region
      %3134 = dma.done [#allocation4], 16
    $region45: #{tpu_custom_call.1} parent=1 // pred_fallthru
      _
    %3135 = vsyncpa [#allocation4], 1

</llo_original>
